<compile_context>
chip_gen: v7x
topology: tpu7x:2x2x1
jax: 0.10.0
libtpu: 0.0.40
codegen_flags: <defaults>
</compile_context>

<pallas_src>
import functools

import jax
import jax.numpy as jnp
import numpy as np
from jax.experimental import pallas as pl
from jax.experimental.pallas import tpu as pltpu

# bf16 matmul inputs run the MXU at full rate; elementwise / accumulation / LIF
# state stay f32 (v5e VPU has no bf16 path).
MATMUL_DTYPE = jnp.bfloat16

_VMEM_SPEC = pl.BlockSpec(memory_space=pltpu.MemorySpace.VMEM)


def _round_up(x, m):
    return ((x + m - 1) // m) * m


@functools.lru_cache(maxsize=1)
def _big_vmem():
    """True on 128-MiB-VMEM chips (v5e/v6e); False on v7x (64 MiB) / unknown."""
    try:
        return pltpu.get_tpu_info().vmem_capacity_bytes >= 96 * 1024 * 1024
    except Exception:  # any failure -> stay conservative
        return False


def _vmem_limit_bytes():
    return (64 if _big_vmem() else 32) * 1024 * 1024


def _conv_tile_n():
    # Bigger tiles amortize per-grid-step overhead on 128-MiB-VMEM chips;
    # keep 512 where VMEM is 64 MiB (v7x) or unknown.
    return 1024 if _big_vmem() else 512


# ----------------------------------------------------------------------------
# Pallas kernels
# ----------------------------------------------------------------------------
def conv_relu_pool_kernel(p_ref, w_ref, b_ref, o_ref):
    """Fused 3x3 conv (im2col matmul) + bias + ReLU + 2x2 max-pool, one N tile.

    p_ref : [4, TILE_N, K]  4 pool-window groups for this tile (bf16), K = 9*Cin
    w_ref : [K, Cout]       (bf16)
    b_ref : [1, Cout]       (f32)
    o_ref : [TILE_N, Cout]  (bf16 or f32)
    """
    tn = o_ref.shape[0]
    k = p_ref.shape[-1]
    # Single fused MXU matmul over all 4 pool positions, f32 accumulation.
    # The reshape is a layout no-op (tn % 8 == 0, lane dim K unchanged).
    y = jnp.dot(p_ref[...].reshape(4 * tn, k), w_ref[...],
                preferred_element_type=jnp.float32)
    # 2x2 max-pool = max over the 4 row-groups; ReLU/bias commute with the max.
    m = y[0:tn]
    for g in range(1, 4):
        m = jnp.maximum(m, y[g * tn:(g + 1) * tn])
    o_ref[...] = jnp.maximum(m + b_ref[...], 0.0).astype(o_ref.dtype)


def fused_spiking_kernel(x_ref, w_ref, b_ref, spikes_ref, sum2_ref, *,
                         time_steps, threshold, leak_factor, hp):
    """Both leaky integrate-and-fire layers in one call (V starts at 0).

    x_ref      : [B, F]          flattened conv features
    w_ref      : [F, Hp + Op]    w1 | w2 concatenated along the output axis (f32)
    b_ref      : [1, Hp + Op]    b1 | b2 (f32, zero in padded lanes)
    spikes_ref : [T, B, Hp + Op] per-timestep spikes for both layers (f32)
    sum2_ref   : [B, Op]         sum over time of layer-2 spikes (f32)
    """
    x = x_ref[...].astype(jnp.float32)
    # Reference recomputes fc(x) every step but x never changes -> hoist it.
    cur = jnp.dot(x, w_ref[...], preferred_element_type=jnp.float32) + b_ref[...]
    v = jnp.zeros_like(cur)
    acc2 = jnp.zeros(sum2_ref.shape, jnp.float32)
    for t in range(time_steps):          # static unroll, T is small
        v = v * leak_factor + cur
        s = (v >= threshold).astype(jnp.float32)
        v = v * (1.0 - s)                # hard reset-to-zero (as reference)
        spikes_ref[t] = s                # lane-dense store ((Hp+Op) % 128 == 0)
        acc2 = acc2 + s[:, hp:]          # lane-aligned slice (hp % 128 == 0)
    sum2_ref[...] = acc2


# ----------------------------------------------------------------------------
# Wrappers (glue: padding, im2col, reshapes)
# ----------------------------------------------------------------------------
def _im2col_pool_groups(x_nhwc, n_pad):
    """x: [B,H,W,C] (bf16) -> [4, n_pad, 9*C] pool-window groups (no transpose)."""
    B, H, W, C = x_nhwc.shape
    xp = jnp.pad(x_nhwc, ((0, 0), (1, 1), (1, 1), (0, 0)))
    patches = jnp.stack(
        [xp[:, kh:kh + H, kw:kw + W, :] for kh in range(3) for kw in range(3)],
        axis=3)                                   # [B, H, W, 9, C]
    patches = patches.reshape(B, H, W, 9 * C)     # (kh, kw, cin) ordering
    Ho, Wo = H // 2, W // 2
    N = B * Ho * Wo
    groups = jnp.stack(
        [patches[:, di::2, dj::2, :].reshape(N, 9 * C)
         for di in range(2) for dj in range(2)], axis=0)   # [4, N, 9C]
    if n_pad > N:
        groups = jnp.pad(groups, ((0, 0), (0, n_pad - N), (0, 0)))
    return groups


def conv_relu_pool(x_nhwc, w_hwio, b, out_dtype=MATMUL_DTYPE):
    B, H, W, Cin = x_nhwc.shape
    Cout = w_hwio.shape[-1]
    Ho, Wo = H // 2, W // 2
    N = B * Ho * Wo
    K = 9 * Cin
    # Split N in (at least) two tiles when it fits a single tile so the 1-D
    # "parallel" grid actually spans both v7x TensorCores; harmless elsewhere.
    tn = min(_conv_tile_n(), max(8, _round_up((N + 1) // 2, 8)))
    n_pad = _round_up(N, tn)
    nt = n_pad // tn

    groups = _im2col_pool_groups(x_nhwc.astype(MATMUL_DTYPE), n_pad)
    wmat = w_hwio.reshape(K, Cout).astype(MATMUL_DTYPE)
    bmat = b.reshape(1, Cout).astype(jnp.float32)

    # Deeper slab pipelining only when the grid is deep enough to use it.
    slab_kwargs = dict(pipeline_mode=pl.Buffered(3)) if nt >= 3 else {}

    out = pl.pallas_call(
        conv_relu_pool_kernel,
        grid=(nt,),
        out_shape=jax.ShapeDtypeStruct((n_pad, Cout), out_dtype),
        in_specs=[
            pl.BlockSpec((4, tn, K), lambda i: (0, i, 0), **slab_kwargs),
            pl.BlockSpec((K, Cout), lambda i: (0, 0)),
            pl.BlockSpec((1, Cout), lambda i: (0, 0)),
        ],
        out_specs=pl.BlockSpec((tn, Cout), lambda i: (i, 0)),
        compiler_params=pltpu.CompilerParams(
            dimension_semantics=("parallel",),
            vmem_limit_bytes=_vmem_limit_bytes(),
        ),
    )(groups, wmat, bmat)
    return out[:N].reshape(B, Ho, Wo, Cout)


def fused_spiking_layers(x, w1, b1, w2, b2, *, time_steps=5,
                         threshold=1.0, leak_factor=0.5):
    """Runs spiking1 and spiking2 (both fed `x`, as in the reference) fused."""
    B, F = x.shape
    H = w1.shape[1]
    O = w2.shape[1]
    Hp = _round_up(H, 128)
    Op = _round_up(O, 128)
    Wtot = Hp + Op

    # One fused GEMM: concatenate zero-padded weights along the output axis.
    # Kept f32 so rounding cannot flip spikes at the hard threshold.
    wc = jnp.zeros((F, Wtot), jnp.float32)
    wc = wc.at[:, :H].set(w1.astype(jnp.float32))
    wc = wc.at[:, Hp:Hp + O].set(w2.astype(jnp.float32))
    bc = jnp.zeros((1, Wtot), jnp.float32)
    bc = bc.at[0, :H].set(b1.astype(jnp.float32))
    bc = bc.at[0, Hp:Hp + O].set(b2.astype(jnp.float32))

    kernel = functools.partial(fused_spiking_kernel,
                               time_steps=time_steps,
                               threshold=threshold,
                               leak_factor=leak_factor,
                               hp=Hp)
    spikes, sum2 = pl.pallas_call(
        kernel,
        out_shape=(
            jax.ShapeDtypeStruct((time_steps, B, Wtot), jnp.float32),
            jax.ShapeDtypeStruct((B, Op), jnp.float32),
        ),
        in_specs=[_VMEM_SPEC] * 3,
        out_specs=(_VMEM_SPEC, _VMEM_SPEC),
        compiler_params=pltpu.CompilerParams(
            vmem_limit_bytes=_vmem_limit_bytes()),
    )(x, wc, bc)

    spikes1 = spikes[:, :, :H]
    spikes2 = spikes[:, :, Hp:Hp + O]
    return spikes1, spikes2, sum2[:, :O]


@functools.partial(jax.jit, static_argnames=("time_steps",))
def snn_forward_arrays(x_nchw, params, *, time_steps=5):
    """Full SpikingNeuralNetwork.forward; returns arrays (no python lists)."""
    # NCHW -> NHWC, bf16 *before* im2col so the 9x expansion moves 2-byte elems.
    x = jnp.transpose(x_nchw, (0, 2, 3, 1)).astype(MATMUL_DTYPE)
    x = conv_relu_pool(x, params["w1"], params["b1"])
    x = conv_relu_pool(x, params["w2"], params["b2"])
    # conv3 output feeds the spiking threshold; keep it f32 (it is tiny).
    x = conv_relu_pool(x, params["w3"], params["b3"], out_dtype=jnp.float32)
    B = x.shape[0]
    # flatten in PyTorch's (C, H, W) order to match x.view(B, -1) on NCHW
    flat = jnp.transpose(x, (0, 3, 1, 2)).reshape(B, -1)

    # NOTE: reference feeds `flat` (not spikes1) to spiking2 -> fuse both layers.
    spikes1, spikes2, sum2 = fused_spiking_layers(
        flat, params["ws1"], params["bs1"], params["ws2"], params["bs2"],
        time_steps=time_steps)
    return sum2, spikes1, spikes2


def snn_forward(x_nchw, params, time_steps=5):
    """API-compatible wrapper: (sum of spikes2, [spikes1_t], [spikes2_t])."""
    sum2, spikes1, spikes2 = snn_forward_arrays(x_nchw, params,
                                                time_steps=time_steps)
    return (sum2,
            [spikes1[t] for t in range(time_steps)],
            [spikes2[t] for t in range(time_steps)])


# ----------------------------------------------------------------------------
# Deterministic parameter construction
# ----------------------------------------------------------------------------
def make_params(key, H, W, hidden_size, num_classes):
    flat_size = 64 * (H // 8) * (W // 8)
    assert hidden_size == flat_size, \
        "reference forward requires hidden_size == flat_size (spiking2 gets flat x)"

    def uinit(k, shape, fan_in):
        bound = 1.0 / np.sqrt(fan_in)
        return jax.random.uniform(k, shape, jnp.float32, -bound, bound)

    ks = jax.random.split(key, 10)
    params = {
        "w1": uinit(ks[0], (3, 3, 3, 16), 3 * 9),      # HWIO
        "b1": uinit(ks[1], (16,), 3 * 9),
        "w2": uinit(ks[2], (3, 3, 16, 32), 16 * 9),
        "b2": uinit(ks[3], (32,), 16 * 9),
        "w3": uinit(ks[4], (3, 3, 32, 64), 32 * 9),
        "b3": uinit(ks[5], (64,), 32 * 9),
        "ws1": uinit(ks[6], (flat_size, hidden_size), flat_size),   # [in, out]
        "bs1": uinit(ks[7], (hidden_size,), flat_size),
        "ws2": uinit(ks[8], (hidden_size, num_classes), hidden_size),
        "bs2": uinit(ks[9], (num_classes,), hidden_size),
    }
    return params


if __name__ == "__main__":
    B, C, H, W = 2, 3, 16, 16
    flat_size = 64 * (H // 8) * (W // 8)   # 256 for 16x16 input
    hidden_size = flat_size                # required by the reference forward
    num_classes = 8
    time_steps = 5

    key = jax.random.PRNGKey(0)
    k_params, k_x = jax.random.split(key)
    params = make_params(k_params, H, W, hidden_size, num_classes)
    x = jax.random.normal(k_x, (B, C, H, W), dtype=jnp.float32)

    logits_sum, spikes1_list, spikes2_list = snn_forward(x, params,
                                                         time_steps=time_steps)
    jax.block_until_ready(logits_sum)
    jax.block_until_ready(spikes1_list)
    jax.block_until_ready(spikes2_list)

    assert logits_sum.shape == (B, num_classes)
    assert len(spikes1_list) == time_steps
    assert spikes1_list[0].shape == (B, hidden_size)
    assert len(spikes2_list) == time_steps
    assert spikes2_list[0].shape == (B, num_classes)
    assert bool(jnp.all(jnp.isfinite(logits_sum)))
    # internal consistency: kernel-side sum2 == sum over time of spikes2
    assert bool(jnp.allclose(logits_sum, sum(spikes2_list)))

    print("KERNEL_OK")
</pallas_src>

<mosaic_0001>
module attributes {stable_mosaic.version = 11 : i64} {
  func.func @conv_relu_pool_kernel(%arg0: i32, %arg1: memref<4x64x27xbf16, #tpu.memory_space<vmem>>, %arg2: memref<27x16xbf16, #tpu.memory_space<vmem>>, %arg3: memref<1x16xf32, #tpu.memory_space<vmem>>, %arg4: memref<64x16xbf16, #tpu.memory_space<vmem>>) attributes {dimension_semantics = [#tpu.dimension_semantics<parallel>], iteration_bounds = array<i64: 2>, scalar_prefetch = 0 : i64, scratch_operands = 0 : i64, tpu.core_type = #tpu.core_type<tc>, window_params = [{transform_indices = @transform_0, window_bounds = array<i64: 4, 64, 27>}, {pipeline_mode = #tpu.pipeline_mode<synchronous>, transform_indices = @transform_1, window_bounds = array<i64: 27, 16>}, {pipeline_mode = #tpu.pipeline_mode<synchronous>, transform_indices = @transform_2, window_bounds = array<i64: 1, 16>}, {transform_indices = @transform_3, window_bounds = array<i64: 64, 16>}]} {
    %c0 = arith.constant 0 : index
    %c0_0 = arith.constant 0 : index
    %c0_1 = arith.constant 0 : index
    %0 = vector.load %arg1[%c0, %c0_0, %c0_1] : memref<4x64x27xbf16, #tpu.memory_space<vmem>>, vector<4x64x27xbf16>
    %1 = vector.shape_cast %0 : vector<4x64x27xbf16> to vector<256x27xbf16>
    %c0_2 = arith.constant 0 : index
    %c0_3 = arith.constant 0 : index
    %2 = vector.load %arg2[%c0_2, %c0_3] : memref<27x16xbf16, #tpu.memory_space<vmem>>, vector<27x16xbf16>
    %cst = arith.constant dense<0.000000e+00> : vector<256x16xf32>
    %3 = tpu.matmul %1, %2, %cst {dimension_numbers = #tpu.dot_dimension_numbers<[1], [0], [0], [1], [0, 0, 1, 1], [], []>} : vector<256x27xbf16>, vector<27x16xbf16>, vector<256x16xf32> -> vector<256x16xf32>
    %4 = vector.extract_strided_slice %3 {offsets = [0, 0], sizes = [64, 16], strides = [1, 1]} : vector<256x16xf32> to vector<64x16xf32>
    %5 = vector.extract_strided_slice %3 {offsets = [64, 0], sizes = [64, 16], strides = [1, 1]} : vector<256x16xf32> to vector<64x16xf32>
    %6 = arith.maximumf %4, %5 : vector<64x16xf32>
    %7 = vector.extract_strided_slice %3 {offsets = [128, 0], sizes = [64, 16], strides = [1, 1]} : vector<256x16xf32> to vector<64x16xf32>
    %8 = arith.maximumf %6, %7 : vector<64x16xf32>
    %9 = vector.extract_strided_slice %3 {offsets = [192, 0], sizes = [64, 16], strides = [1, 1]} : vector<256x16xf32> to vector<64x16xf32>
    %10 = arith.maximumf %8, %9 : vector<64x16xf32>
    %c0_4 = arith.constant 0 : index
    %c0_5 = arith.constant 0 : index
    %11 = vector.load %arg3[%c0_4, %c0_5] : memref<1x16xf32, #tpu.memory_space<vmem>>, vector<1x16xf32>
    %12 = vector.broadcast %11 : vector<1x16xf32> to vector<64x16xf32>
    %13 = arith.addf %10, %12 : vector<64x16xf32>
    %cst_6 = arith.constant 0.000000e+00 : f32
    %14 = vector.broadcast %cst_6 : f32 to vector<64x16xf32>
    %15 = arith.maximumf %13, %14 : vector<64x16xf32>
    %16 = arith.truncf %15 : vector<64x16xf32> to vector<64x16xbf16>
    %c0_7 = arith.constant 0 : index
    %c0_8 = arith.constant 0 : index
    %17 = vector.load %arg4[%c0_7, %c0_8] : memref<64x16xbf16, #tpu.memory_space<vmem>>, vector<64x16xbf16>
    tpu.vector_store %arg4[%c0_7, %c0_8], %16 {strides = array<i32>} : memref<64x16xbf16, #tpu.memory_space<vmem>>, vector<64x16xbf16>,
    return
  }
  func.func @transform_0(%arg0: i32) -> (i32, i32, i32) {
    %c0_i32 = arith.constant 0 : i32
    %c0_i32_0 = arith.constant 0 : i32
    %c0_i32_1 = arith.constant 0 : i32
    return %c0_i32, %arg0, %c0_i32_0 : i32, i32, i32
  }
  func.func @transform_1(%arg0: i32) -> (i32, i32) {
    %c0_i32 = arith.constant 0 : i32
    %c0_i32_0 = arith.constant 0 : i32
    %c0_i32_1 = arith.constant 0 : i32
    return %c0_i32, %c0_i32_0 : i32, i32
  }
  func.func @transform_2(%arg0: i32) -> (i32, i32) {
    %c0_i32 = arith.constant 0 : i32
    %c0_i32_0 = arith.constant 0 : i32
    %c0_i32_1 = arith.constant 0 : i32
    return %c0_i32, %c0_i32_0 : i32, i32
  }
  func.func @transform_3(%arg0: i32) -> (i32, i32) {
    %c0_i32 = arith.constant 0 : i32
    %c0_i32_0 = arith.constant 0 : i32
    return %arg0, %c0_i32 : i32, i32
  }
}

module attributes {stable_mosaic.version = 11 : i64} {
  func.func @conv_relu_pool_kernel(%arg0: i32, %arg1: memref<4x16x144xbf16, #tpu.memory_space<vmem>>, %arg2: memref<144x32xbf16, #tpu.memory_space<vmem>>, %arg3: memref<1x32xf32, #tpu.memory_space<vmem>>, %arg4: memref<16x32xbf16, #tpu.memory_space<vmem>>) attributes {dimension_semantics = [#tpu.dimension_semantics<parallel>], iteration_bounds = array<i64: 2>, scalar_prefetch = 0 : i64, scratch_operands = 0 : i64, tpu.core_type = #tpu.core_type<tc>, window_params = [{transform_indices = @transform_0, window_bounds = array<i64: 4, 16, 144>}, {pipeline_mode = #tpu.pipeline_mode<synchronous>, transform_indices = @transform_1, window_bounds = array<i64: 144, 32>}, {pipeline_mode = #tpu.pipeline_mode<synchronous>, transform_indices = @transform_2, window_bounds = array<i64: 1, 32>}, {transform_indices = @transform_3, window_bounds = array<i64: 16, 32>}]} {
    %c0 = arith.constant 0 : index
    %c0_0 = arith.constant 0 : index
    %c0_1 = arith.constant 0 : index
    %0 = vector.load %arg1[%c0, %c0_0, %c0_1] : memref<4x16x144xbf16, #tpu.memory_space<vmem>>, vector<4x16x144xbf16>
    %1 = vector.shape_cast %0 : vector<4x16x144xbf16> to vector<64x144xbf16>
    %c0_2 = arith.constant 0 : index
    %c0_3 = arith.constant 0 : index
    %2 = vector.load %arg2[%c0_2, %c0_3] : memref<144x32xbf16, #tpu.memory_space<vmem>>, vector<144x32xbf16>
    %cst = arith.constant dense<0.000000e+00> : vector<64x32xf32>
    %3 = tpu.matmul %1, %2, %cst {dimension_numbers = #tpu.dot_dimension_numbers<[1], [0], [0], [1], [0, 0, 1, 1], [], []>} : vector<64x144xbf16>, vector<144x32xbf16>, vector<64x32xf32> -> vector<64x32xf32>
    %4 = vector.extract_strided_slice %3 {offsets = [0, 0], sizes = [16, 32], strides = [1, 1]} : vector<64x32xf32> to vector<16x32xf32>
    %5 = vector.extract_strided_slice %3 {offsets = [16, 0], sizes = [16, 32], strides = [1, 1]} : vector<64x32xf32> to vector<16x32xf32>
    %6 = arith.maximumf %4, %5 : vector<16x32xf32>
    %7 = vector.extract_strided_slice %3 {offsets = [32, 0], sizes = [16, 32], strides = [1, 1]} : vector<64x32xf32> to vector<16x32xf32>
    %8 = arith.maximumf %6, %7 : vector<16x32xf32>
    %9 = vector.extract_strided_slice %3 {offsets = [48, 0], sizes = [16, 32], strides = [1, 1]} : vector<64x32xf32> to vector<16x32xf32>
    %10 = arith.maximumf %8, %9 : vector<16x32xf32>
    %c0_4 = arith.constant 0 : index
    %c0_5 = arith.constant 0 : index
    %11 = vector.load %arg3[%c0_4, %c0_5] : memref<1x32xf32, #tpu.memory_space<vmem>>, vector<1x32xf32>
    %12 = vector.broadcast %11 : vector<1x32xf32> to vector<16x32xf32>
    %13 = arith.addf %10, %12 : vector<16x32xf32>
    %cst_6 = arith.constant 0.000000e+00 : f32
    %14 = vector.broadcast %cst_6 : f32 to vector<16x32xf32>
    %15 = arith.maximumf %13, %14 : vector<16x32xf32>
    %16 = arith.truncf %15 : vector<16x32xf32> to vector<16x32xbf16>
    %c0_7 = arith.constant 0 : index
    %c0_8 = arith.constant 0 : index
    %17 = vector.load %arg4[%c0_7, %c0_8] : memref<16x32xbf16, #tpu.memory_space<vmem>>, vector<16x32xbf16>
    tpu.vector_store %arg4[%c0_7, %c0_8], %16 {strides = array<i32>} : memref<16x32xbf16, #tpu.memory_space<vmem>>, vector<16x32xbf16>,
    return
  }
  func.func @transform_0(%arg0: i32) -> (i32, i32, i32) {
    %c0_i32 = arith.constant 0 : i32
    %c0_i32_0 = arith.constant 0 : i32
    %c0_i32_1 = arith.constant 0 : i32
    return %c0_i32, %arg0, %c0_i32_0 : i32, i32, i32
  }
  func.func @transform_1(%arg0: i32) -> (i32, i32) {
    %c0_i32 = arith.constant 0 : i32
    %c0_i32_0 = arith.constant 0 : i32
    %c0_i32_1 = arith.constant 0 : i32
    return %c0_i32, %c0_i32_0 : i32, i32
  }
  func.func @transform_2(%arg0: i32) -> (i32, i32) {
    %c0_i32 = arith.constant 0 : i32
    %c0_i32_0 = arith.constant 0 : i32
    %c0_i32_1 = arith.constant 0 : i32
    return %c0_i32, %c0_i32_0 : i32, i32
  }
  func.func @transform_3(%arg0: i32) -> (i32, i32) {
    %c0_i32 = arith.constant 0 : i32
    %c0_i32_0 = arith.constant 0 : i32
    return %arg0, %c0_i32 : i32, i32
  }
}

module attributes {stable_mosaic.version = 11 : i64} {
  func.func @conv_relu_pool_kernel(%arg0: i32, %arg1: memref<4x8x288xbf16, #tpu.memory_space<vmem>>, %arg2: memref<288x64xbf16, #tpu.memory_space<vmem>>, %arg3: memref<1x64xf32, #tpu.memory_space<vmem>>, %arg4: memref<8x64xf32, #tpu.memory_space<vmem>>) attributes {dimension_semantics = [#tpu.dimension_semantics<parallel>], iteration_bounds = array<i64: 1>, scalar_prefetch = 0 : i64, scratch_operands = 0 : i64, tpu.core_type = #tpu.core_type<tc>, window_params = [{transform_indices = @transform_0, window_bounds = array<i64: 4, 8, 288>}, {pipeline_mode = #tpu.pipeline_mode<synchronous>, transform_indices = @transform_1, window_bounds = array<i64: 288, 64>}, {pipeline_mode = #tpu.pipeline_mode<synchronous>, transform_indices = @transform_2, window_bounds = array<i64: 1, 64>}, {transform_indices = @transform_3, window_bounds = array<i64: 8, 64>}]} {
    %c0 = arith.constant 0 : index
    %c0_0 = arith.constant 0 : index
    %c0_1 = arith.constant 0 : index
    %0 = vector.load %arg1[%c0, %c0_0, %c0_1] : memref<4x8x288xbf16, #tpu.memory_space<vmem>>, vector<4x8x288xbf16>
    %1 = vector.shape_cast %0 : vector<4x8x288xbf16> to vector<32x288xbf16>
    %c0_2 = arith.constant 0 : index
    %c0_3 = arith.constant 0 : index
    %2 = vector.load %arg2[%c0_2, %c0_3] : memref<288x64xbf16, #tpu.memory_space<vmem>>, vector<288x64xbf16>
    %cst = arith.constant dense<0.000000e+00> : vector<32x64xf32>
    %3 = tpu.matmul %1, %2, %cst {dimension_numbers = #tpu.dot_dimension_numbers<[1], [0], [0], [1], [0, 0, 1, 1], [], []>} : vector<32x288xbf16>, vector<288x64xbf16>, vector<32x64xf32> -> vector<32x64xf32>
    %4 = vector.extract_strided_slice %3 {offsets = [0, 0], sizes = [8, 64], strides = [1, 1]} : vector<32x64xf32> to vector<8x64xf32>
    %5 = vector.extract_strided_slice %3 {offsets = [8, 0], sizes = [8, 64], strides = [1, 1]} : vector<32x64xf32> to vector<8x64xf32>
    %6 = arith.maximumf %4, %5 : vector<8x64xf32>
    %7 = vector.extract_strided_slice %3 {offsets = [16, 0], sizes = [8, 64], strides = [1, 1]} : vector<32x64xf32> to vector<8x64xf32>
    %8 = arith.maximumf %6, %7 : vector<8x64xf32>
    %9 = vector.extract_strided_slice %3 {offsets = [24, 0], sizes = [8, 64], strides = [1, 1]} : vector<32x64xf32> to vector<8x64xf32>
    %10 = arith.maximumf %8, %9 : vector<8x64xf32>
    %c0_4 = arith.constant 0 : index
    %c0_5 = arith.constant 0 : index
    %11 = vector.load %arg3[%c0_4, %c0_5] : memref<1x64xf32, #tpu.memory_space<vmem>>, vector<1x64xf32>
    %12 = vector.broadcast %11 : vector<1x64xf32> to vector<8x64xf32>
    %13 = arith.addf %10, %12 : vector<8x64xf32>
    %cst_6 = arith.constant 0.000000e+00 : f32
    %14 = vector.broadcast %cst_6 : f32 to vector<8x64xf32>
    %15 = arith.maximumf %13, %14 : vector<8x64xf32>
    %c0_7 = arith.constant 0 : index
    %c0_8 = arith.constant 0 : index
    %16 = vector.load %arg4[%c0_7, %c0_8] : memref<8x64xf32, #tpu.memory_space<vmem>>, vector<8x64xf32>
    tpu.vector_store %arg4[%c0_7, %c0_8], %15 {strides = array<i32>} : memref<8x64xf32, #tpu.memory_space<vmem>>, vector<8x64xf32>,
    return
  }
  func.func @transform_0(%arg0: i32) -> (i32, i32, i32) {
    %c0_i32 = arith.constant 0 : i32
    %c0_i32_0 = arith.constant 0 : i32
    %c0_i32_1 = arith.constant 0 : i32
    return %c0_i32, %arg0, %c0_i32_0 : i32, i32, i32
  }
  func.func @transform_1(%arg0: i32) -> (i32, i32) {
    %c0_i32 = arith.constant 0 : i32
    %c0_i32_0 = arith.constant 0 : i32
    %c0_i32_1 = arith.constant 0 : i32
    return %c0_i32, %c0_i32_0 : i32, i32
  }
  func.func @transform_2(%arg0: i32) -> (i32, i32) {
    %c0_i32 = arith.constant 0 : i32
    %c0_i32_0 = arith.constant 0 : i32
    %c0_i32_1 = arith.constant 0 : i32
    return %c0_i32, %c0_i32_0 : i32, i32
  }
  func.func @transform_3(%arg0: i32) -> (i32, i32) {
    %c0_i32 = arith.constant 0 : i32
    %c0_i32_0 = arith.constant 0 : i32
    return %arg0, %c0_i32 : i32, i32
  }
}

module attributes {stable_mosaic.version = 11 : i64} {
  func.func @fused_spiking_kernel(%arg0: memref<2x256xf32, #tpu.memory_space<vmem>>, %arg1: memref<256x384xf32, #tpu.memory_space<vmem>>, %arg2: memref<1x384xf32, #tpu.memory_space<vmem>>, %arg3: memref<5x2x384xf32, #tpu.memory_space<vmem>>, %arg4: memref<2x128xf32, #tpu.memory_space<vmem>>) attributes {dimension_semantics = [], scalar_prefetch = 0 : i64, scratch_operands = 0 : i64, tpu.core_type = #tpu.core_type<tc>} {
    %c0 = arith.constant 0 : index
    %c0_0 = arith.constant 0 : index
    %0 = vector.load %arg0[%c0, %c0_0] : memref<2x256xf32, #tpu.memory_space<vmem>>, vector<2x256xf32>
    %c0_1 = arith.constant 0 : index
    %c0_2 = arith.constant 0 : index
    %1 = vector.load %arg1[%c0_1, %c0_2] : memref<256x384xf32, #tpu.memory_space<vmem>>, vector<256x384xf32>
    %cst = arith.constant dense<0.000000e+00> : vector<2x384xf32>
    %2 = tpu.matmul %0, %1, %cst {dimension_numbers = #tpu.dot_dimension_numbers<[1], [0], [0], [1], [0, 0, 1, 1], [], []>} : vector<2x256xf32>, vector<256x384xf32>, vector<2x384xf32> -> vector<2x384xf32>
    %c0_3 = arith.constant 0 : index
    %c0_4 = arith.constant 0 : index
    %3 = vector.load %arg2[%c0_3, %c0_4] : memref<1x384xf32, #tpu.memory_space<vmem>>, vector<1x384xf32>
    %4 = vector.broadcast %3 : vector<1x384xf32> to vector<2x384xf32>
    %5 = arith.addf %2, %4 : vector<2x384xf32>
    %cst_5 = arith.constant 0.000000e+00 : f32
    %6 = vector.broadcast %cst_5 : f32 to vector<2x384xf32>
    %cst_6 = arith.constant 0.000000e+00 : f32
    %7 = vector.broadcast %cst_6 : f32 to vector<2x128xf32>
    %cst_7 = arith.constant 5.000000e-01 : f32
    %8 = vector.broadcast %cst_7 : f32 to vector<2x384xf32>
    %9 = arith.mulf %6, %8 : vector<2x384xf32>
    %10 = arith.addf %9, %5 : vector<2x384xf32>
    %cst_8 = arith.constant 1.000000e+00 : f32
    %11 = vector.broadcast %cst_8 : f32 to vector<2x384xf32>
    %12 = arith.cmpf oge, %10, %11 : vector<2x384xf32>
    %13 = arith.extui %12 : vector<2x384xi1> to vector<2x384xi32>
    %14 = arith.sitofp %13 : vector<2x384xi32> to vector<2x384xf32>
    %cst_9 = arith.constant 1.000000e+00 : f32
    %15 = vector.broadcast %cst_9 : f32 to vector<2x384xf32>
    %16 = arith.subf %15, %14 : vector<2x384xf32>
    %17 = arith.mulf %10, %16 : vector<2x384xf32>
    %c0_10 = arith.constant 0 : index
    %c0_11 = arith.constant 0 : index
    %c0_12 = arith.constant 0 : index
    %18 = vector.load %arg3[%c0_10, %c0_11, %c0_12] : memref<5x2x384xf32, #tpu.memory_space<vmem>>, vector<1x2x384xf32>
    %19 = vector.shape_cast %18 : vector<1x2x384xf32> to vector<2x384xf32>
    %20 = vector.shape_cast %14 : vector<2x384xf32> to vector<1x2x384xf32>
    tpu.vector_store %arg3[%c0_10, %c0_11, %c0_12], %20 {strides = array<i32>} : memref<5x2x384xf32, #tpu.memory_space<vmem>>, vector<1x2x384xf32>,
    %21 = vector.extract_strided_slice %14 {offsets = [0, 256], sizes = [2, 128], strides = [1, 1]} : vector<2x384xf32> to vector<2x128xf32>
    %22 = arith.addf %7, %21 : vector<2x128xf32>
    %cst_13 = arith.constant 5.000000e-01 : f32
    %23 = vector.broadcast %cst_13 : f32 to vector<2x384xf32>
    %24 = arith.mulf %17, %23 : vector<2x384xf32>
    %25 = arith.addf %24, %5 : vector<2x384xf32>
    %cst_14 = arith.constant 1.000000e+00 : f32
    %26 = vector.broadcast %cst_14 : f32 to vector<2x384xf32>
    %27 = arith.cmpf oge, %25, %26 : vector<2x384xf32>
    %28 = arith.extui %27 : vector<2x384xi1> to vector<2x384xi32>
    %29 = arith.sitofp %28 : vector<2x384xi32> to vector<2x384xf32>
    %cst_15 = arith.constant 1.000000e+00 : f32
    %30 = vector.broadcast %cst_15 : f32 to vector<2x384xf32>
    %31 = arith.subf %30, %29 : vector<2x384xf32>
    %32 = arith.mulf %25, %31 : vector<2x384xf32>
    %c1 = arith.constant 1 : index
    %c0_16 = arith.constant 0 : index
    %c0_17 = arith.constant 0 : index
    %33 = vector.load %arg3[%c1, %c0_16, %c0_17] : memref<5x2x384xf32, #tpu.memory_space<vmem>>, vector<1x2x384xf32>
    %34 = vector.shape_cast %33 : vector<1x2x384xf32> to vector<2x384xf32>
    %35 = vector.shape_cast %29 : vector<2x384xf32> to vector<1x2x384xf32>
    tpu.vector_store %arg3[%c1, %c0_16, %c0_17], %35 {strides = array<i32>} : memref<5x2x384xf32, #tpu.memory_space<vmem>>, vector<1x2x384xf32>,
    %36 = vector.extract_strided_slice %29 {offsets = [0, 256], sizes = [2, 128], strides = [1, 1]} : vector<2x384xf32> to vector<2x128xf32>
    %37 = arith.addf %22, %36 : vector<2x128xf32>
    %cst_18 = arith.constant 5.000000e-01 : f32
    %38 = vector.broadcast %cst_18 : f32 to vector<2x384xf32>
    %39 = arith.mulf %32, %38 : vector<2x384xf32>
    %40 = arith.addf %39, %5 : vector<2x384xf32>
    %cst_19 = arith.constant 1.000000e+00 : f32
    %41 = vector.broadcast %cst_19 : f32 to vector<2x384xf32>
    %42 = arith.cmpf oge, %40, %41 : vector<2x384xf32>
    %43 = arith.extui %42 : vector<2x384xi1> to vector<2x384xi32>
    %44 = arith.sitofp %43 : vector<2x384xi32> to vector<2x384xf32>
    %cst_20 = arith.constant 1.000000e+00 : f32
    %45 = vector.broadcast %cst_20 : f32 to vector<2x384xf32>
    %46 = arith.subf %45, %44 : vector<2x384xf32>
    %47 = arith.mulf %40, %46 : vector<2x384xf32>
    %c2 = arith.constant 2 : index
    %c0_21 = arith.constant 0 : index
    %c0_22 = arith.constant 0 : index
    %48 = vector.load %arg3[%c2, %c0_21, %c0_22] : memref<5x2x384xf32, #tpu.memory_space<vmem>>, vector<1x2x384xf32>
    %49 = vector.shape_cast %48 : vector<1x2x384xf32> to vector<2x384xf32>
    %50 = vector.shape_cast %44 : vector<2x384xf32> to vector<1x2x384xf32>
    tpu.vector_store %arg3[%c2, %c0_21, %c0_22], %50 {strides = array<i32>} : memref<5x2x384xf32, #tpu.memory_space<vmem>>, vector<1x2x384xf32>,
    %51 = vector.extract_strided_slice %44 {offsets = [0, 256], sizes = [2, 128], strides = [1, 1]} : vector<2x384xf32> to vector<2x128xf32>
    %52 = arith.addf %37, %51 : vector<2x128xf32>
    %cst_23 = arith.constant 5.000000e-01 : f32
    %53 = vector.broadcast %cst_23 : f32 to vector<2x384xf32>
    %54 = arith.mulf %47, %53 : vector<2x384xf32>
    %55 = arith.addf %54, %5 : vector<2x384xf32>
    %cst_24 = arith.constant 1.000000e+00 : f32
    %56 = vector.broadcast %cst_24 : f32 to vector<2x384xf32>
    %57 = arith.cmpf oge, %55, %56 : vector<2x384xf32>
    %58 = arith.extui %57 : vector<2x384xi1> to vector<2x384xi32>
    %59 = arith.sitofp %58 : vector<2x384xi32> to vector<2x384xf32>
    %cst_25 = arith.constant 1.000000e+00 : f32
    %60 = vector.broadcast %cst_25 : f32 to vector<2x384xf32>
    %61 = arith.subf %60, %59 : vector<2x384xf32>
    %62 = arith.mulf %55, %61 : vector<2x384xf32>
    %c3 = arith.constant 3 : index
    %c0_26 = arith.constant 0 : index
    %c0_27 = arith.constant 0 : index
    %63 = vector.load %arg3[%c3, %c0_26, %c0_27] : memref<5x2x384xf32, #tpu.memory_space<vmem>>, vector<1x2x384xf32>
    %64 = vector.shape_cast %63 : vector<1x2x384xf32> to vector<2x384xf32>
    %65 = vector.shape_cast %59 : vector<2x384xf32> to vector<1x2x384xf32>
    tpu.vector_store %arg3[%c3, %c0_26, %c0_27], %65 {strides = array<i32>} : memref<5x2x384xf32, #tpu.memory_space<vmem>>, vector<1x2x384xf32>,
    %66 = vector.extract_strided_slice %59 {offsets = [0, 256], sizes = [2, 128], strides = [1, 1]} : vector<2x384xf32> to vector<2x128xf32>
    %67 = arith.addf %52, %66 : vector<2x128xf32>
    %cst_28 = arith.constant 5.000000e-01 : f32
    %68 = vector.broadcast %cst_28 : f32 to vector<2x384xf32>
    %69 = arith.mulf %62, %68 : vector<2x384xf32>
    %70 = arith.addf %69, %5 : vector<2x384xf32>
    %cst_29 = arith.constant 1.000000e+00 : f32
    %71 = vector.broadcast %cst_29 : f32 to vector<2x384xf32>
    %72 = arith.cmpf oge, %70, %71 : vector<2x384xf32>
    %73 = arith.extui %72 : vector<2x384xi1> to vector<2x384xi32>
    %74 = arith.sitofp %73 : vector<2x384xi32> to vector<2x384xf32>
    %c4 = arith.constant 4 : index
    %c0_30 = arith.constant 0 : index
    %c0_31 = arith.constant 0 : index
    %75 = vector.load %arg3[%c4, %c0_30, %c0_31] : memref<5x2x384xf32, #tpu.memory_space<vmem>>, vector<1x2x384xf32>
    %76 = vector.shape_cast %75 : vector<1x2x384xf32> to vector<2x384xf32>
    %77 = vector.shape_cast %74 : vector<2x384xf32> to vector<1x2x384xf32>
    tpu.vector_store %arg3[%c4, %c0_30, %c0_31], %77 {strides = array<i32>} : memref<5x2x384xf32, #tpu.memory_space<vmem>>, vector<1x2x384xf32>,
    %78 = vector.extract_strided_slice %74 {offsets = [0, 256], sizes = [2, 128], strides = [1, 1]} : vector<2x384xf32> to vector<2x128xf32>
    %79 = arith.addf %67, %78 : vector<2x128xf32>
    %c0_32 = arith.constant 0 : index
    %c0_33 = arith.constant 0 : index
    %80 = vector.load %arg4[%c0_32, %c0_33] : memref<2x128xf32, #tpu.memory_space<vmem>>, vector<2x128xf32>
    tpu.vector_store %arg4[%c0_32, %c0_33], %79 {strides = array<i32>} : memref<2x128xf32, #tpu.memory_space<vmem>>, vector<2x128xf32>,
    return
  }
}

</mosaic_0001>

<llo_original>
// kernel: snn_forward_arrays.4
$region0: #{snn_forward_arrays.4}
  #allocation0 [shape = 'u32[]', space=smem, size = 0x4, offset = 0x4, fixed_abs, tag = 'smem constant byte address 0x4 - core index']
  #allocation1 [shape = 'u32[144,128]{1,0:T(1,128)}', space=vmem, size = 0x12000, scoped, tag = 'internal scratch']
  %s0 = inlined_call_operand.vmem [shape: bf16[4,128,27], index: 0, kind: input, shape index: {}]
  %s1 = inlined_call_operand.vmem [shape: bf16[27,16], index: 1, kind: input, shape index: {}]
  %s2 = inlined_call_operand.vmem [shape: f32[1,16], index: 2, kind: input, shape index: {}]
  %s3 = inlined_call_operand.vmem [shape: bf16[128,16], index: 3, kind: output, shape index: {}]
  %s4 = sld [smem:[#allocation0]]
  $region86: #{snn_forward_arrays.4} parent=0
    _
  %s6 = ssub.s32 1, %s4
  %s7 = scalar_select 0, %s6, %s4
  $region1: #{snn_forward_arrays.4} parent=0
    #allocation2 [shape = 'u8[131072]{0}', space=vmem, size = 0x20000, scoped, tag = 'input window, operand 0']
    loop: start=0, step=1, limit=4
    $region2: #{snn_forward_arrays.4} parent=1 // loop_pre_header
      _
    $region3: #{snn_forward_arrays.4} parent=1 // loop_header
      %s9 = sphi 0, %s13
      %p10 = scmp.ge.s32.totalorder %s9, 4
      %s19 = sphi 0, %s21
      %s22 = sphi 0, %s19
      %s23 = sphi 0, %s22
      %s39 = sphi 0, %s23
      %s43 = sphi 0, %s43
      %s45 = sphi 0, %s43
      %s46 = sphi 0, %s45
      %s60 = sphi 0, %s46
      %s64 = sphi 0, %s64
      %s66 = sphi 0, %s64
      %s67 = sphi 0, %s66
      %s81 = sphi 0, %s67
      %s87 = sphi 0, %s89
      %s90 = sphi 0, %s87
      %s91 = sphi 0, %s90
      %s107 = sphi 0, %s91
    $region4: #{snn_forward_arrays.4} parent=1 // loop_header_branch
      %12 = sbr.rel (%p10) target = $region8
    $region5: #{snn_forward_arrays.4} parent=1 // loop_body
      %s14 = ssub.s32 %s9, 1
      %s15 = ssub.s32 %s9, 2
      %s16 = sadd.s32 %s9, 1
      %s17 = ssub.s32 %s9, %s16
      %p18 = scmp.eq.s32.totalorder %s17, 0
      %s20 = sadd.s32 %s19, 1
      %s21 = scalar_select %p18, %s19, %s20
      %p24 = pneg %p18
      %p25 = scmp.eq.s32.totalorder %s9, 1
      %p26 = por %p24, %p25
      %p27 = scmp.ne.s32.totalorder %s19, %s22
      %p28 = scmp.eq.s32.totalorder %s9, 0
      %p29 = por %p27, %p28
      %p30 = scmp.ne.s32.totalorder %s19, %s22
      %p31 = scmp.eq.s32.totalorder %s14, 1
      %p32 = por %p30, %p31
      %p33 = scmp.ne.s32.totalorder %s22, %s23
      %p34 = scmp.eq.s32.totalorder %s14, 0
      %p35 = por %p33, %p34
      %p36 = scmp.ne.s32.totalorder %s22, %s23
      %p37 = scmp.eq.s32.totalorder %s15, 1
      %p38 = por %p36, %p37
      %p40 = scmp.ne.s32.totalorder %s23, %s39
      %p41 = scmp.eq.s32.totalorder %s15, 0
      %p42 = por %p40, %p41
      %s44 = sadd.s32 %s43, 1
      %p47 = scmp.eq.s32.totalorder %s9, 1
      %p48 = scmp.ne.s32.totalorder %s43, %s45
      %p49 = scmp.eq.s32.totalorder %s9, 0
      %p50 = por %p48, %p49
      %p51 = scmp.ne.s32.totalorder %s43, %s45
      %p52 = scmp.eq.s32.totalorder %s14, 1
      %p53 = por %p51, %p52
      %p54 = scmp.ne.s32.totalorder %s45, %s46
      %p55 = scmp.eq.s32.totalorder %s14, 0
      %p56 = por %p54, %p55
      %p57 = scmp.ne.s32.totalorder %s45, %s46
      %p58 = scmp.eq.s32.totalorder %s15, 1
      %p59 = por %p57, %p58
      %p61 = scmp.ne.s32.totalorder %s46, %s60
      %p62 = scmp.eq.s32.totalorder %s15, 0
      %p63 = por %p61, %p62
      %s65 = sadd.s32 %s64, 1
      %p68 = scmp.eq.s32.totalorder %s9, 1
      %p69 = scmp.ne.s32.totalorder %s64, %s66
      %p70 = scmp.eq.s32.totalorder %s9, 0
      %p71 = por %p69, %p70
      %p72 = scmp.ne.s32.totalorder %s64, %s66
      %p73 = scmp.eq.s32.totalorder %s14, 1
      %p74 = por %p72, %p73
      %p75 = scmp.ne.s32.totalorder %s66, %s67
      %p76 = scmp.eq.s32.totalorder %s14, 0
      %p77 = por %p75, %p76
      %p78 = scmp.ne.s32.totalorder %s66, %s67
      %p79 = scmp.eq.s32.totalorder %s15, 1
      %p80 = por %p78, %p79
      %p82 = scmp.ne.s32.totalorder %s67, %s81
      %p83 = scmp.eq.s32.totalorder %s15, 0
      %p84 = por %p82, %p83
      %s85 = ssub.s32 %s9, %s16
      %p86 = scmp.eq.s32.totalorder %s85, 0
      %s88 = sadd.s32 %s87, 1
      %s89 = scalar_select %p86, %s87, %s88
      %p92 = pneg %p86
      %p93 = scmp.eq.s32.totalorder %s9, 1
      %p94 = por %p92, %p93
      %p95 = scmp.ne.s32.totalorder %s87, %s90
      %p96 = scmp.eq.s32.totalorder %s9, 0
      %p97 = por %p95, %p96
      %p98 = scmp.ne.s32.totalorder %s87, %s90
      %p99 = scmp.eq.s32.totalorder %s14, 1
      %p100 = por %p98, %p99
      %p101 = scmp.ne.s32.totalorder %s90, %s91
      %p102 = scmp.eq.s32.totalorder %s14, 0
      %p103 = por %p101, %p102
      %p104 = scmp.ne.s32.totalorder %s90, %s91
      %p105 = scmp.eq.s32.totalorder %s15, 1
      %p106 = por %p104, %p105
      %p108 = scmp.ne.s32.totalorder %s91, %s107
      %p109 = scmp.eq.s32.totalorder %s15, 0
      %p110 = por %p108, %p109
      %p111 = scmp.le.s32.totalorder 1, %s9
      %p112 = scmp.lt.s32.totalorder %s9, 3
      %p113 = pnand %p111, %p112
      %p114 = pneg %p113
      // Predicated region
      $region9: #{snn_forward_arrays.4} parent=5 // pred_check
        _
      $region10: #{snn_forward_arrays.4} parent=5 // pred_check_branch
        %116 = sbr.rel (%p113) target = $region12
      $region11: #{snn_forward_arrays.4} parent=5 // pred_region
        %s117 = ssub.s32 %s9, 1
        // Predicated region
        $region13: #{snn_forward_arrays.4} parent=11 // pred_check
          %p118 = pneg %p56
        $region14: #{snn_forward_arrays.4} parent=11 // pred_check_branch
          %120 = sbr.rel (%p118) target = $region16
        $region15: #{snn_forward_arrays.4} parent=11 // pred_region
          _
        $region16: #{snn_forward_arrays.4} parent=11 // pred_fallthru
          _
        // Predicated region
        $region17: #{snn_forward_arrays.4} parent=11 // pred_check
          %p121 = pneg %p77
        $region18: #{snn_forward_arrays.4} parent=11 // pred_check_branch
          %123 = sbr.rel (%p121) target = $region20
        $region19: #{snn_forward_arrays.4} parent=11 // pred_region
          _
        $region20: #{snn_forward_arrays.4} parent=11 // pred_fallthru
          _
      $region12: #{snn_forward_arrays.4} parent=5 // pred_fallthru
        _
      %p124 = scmp.lt.s32.totalorder %s9, 2
      // Predicated region
      $region21: #{snn_forward_arrays.4} parent=5 // pred_check
        %p125 = pneg %p124
      $region22: #{snn_forward_arrays.4} parent=5 // pred_check_branch
        %127 = sbr.rel (%p125) target = $region24
      $region23: #{snn_forward_arrays.4} parent=5 // pred_region
        // Predicated region
        $region25: #{snn_forward_arrays.4} parent=23 // pred_check
          %p128 = pneg %p29
        $region26: #{snn_forward_arrays.4} parent=23 // pred_check_branch
          %130 = sbr.rel (%p128) target = $region28
        $region27: #{snn_forward_arrays.4} parent=23 // pred_region
          %s131 = sand.u32 %s19, 1
          %s132 = sand.u32 %s19, 1
          %s133 = smul.addr %s132, 128
          %s134 = scalar_lea.vmem [#allocation2], %s133
          %s135 = smul.u32 8, %s9
          %s136 = smul.addr %s135, 4
          %s137 = scalar_lea.vmem %s0, %s136
          // Predicated region
          $region29: #{snn_forward_arrays.4} parent=27 // pred_check
            _
          $region30: #{snn_forward_arrays.4} parent=27 // pred_check_branch
            %139 = sbr.rel (0) target = $region32
          $region31: #{snn_forward_arrays.4} parent=27 // pred_region
            // Predicated region
            $region33: #{snn_forward_arrays.4} parent=31 // pred_check
              _
            $region34: #{snn_forward_arrays.4} parent=31 // pred_check_branch
              %141 = sbr.rel target = $region36
            $region35: #{snn_forward_arrays.4} parent=31 // pred_region
              // Predicated region
              $region48: #{snn_forward_arrays.4} parent=35 // pred_check
                _
              $region49: #{snn_forward_arrays.4} parent=35 // pred_check_branch
                %218 = sbr.rel (0) target = $region51
              $region50: #{snn_forward_arrays.4} parent=35 // pred_region
                loop: start=0, step=1, limit=1
                $region52: #{snn_forward_arrays.4} parent=50 // loop_pre_header
                  _
                $region53: #{snn_forward_arrays.4} parent=50 // loop_header
                  %s220 = sphi 0, %s224
                  %p221 = scmp.ge.s32.totalorder %s220, 1
                  %s225 = sphi %s137, %s137
                  %s226 = sphi %s134, %s134
                $region54: #{snn_forward_arrays.4} parent=50 // loop_header_branch
                  %223 = sbr.rel (%p221) target = $region58
                $region55: #{snn_forward_arrays.4} parent=50 // loop_body
                  _
                $region56: #{snn_forward_arrays.4} parent=50 // loop_footer
                  %s224 = sadd.s32 1, %s220
                $region57: #{snn_forward_arrays.4} parent=50 // loop_footer_branch
                  %219 = sbr.rel target = $region53
                $region58: #{snn_forward_arrays.4} parent=50 // loop_exit
                  _
                loop: start=0, step=1, limit=1
                $region59: #{snn_forward_arrays.4} parent=50 // loop_pre_header
                  _
                $region60: #{snn_forward_arrays.4} parent=50 // loop_header
                  %s229 = sphi 0, %s233
                  %p230 = scmp.ge.s32.totalorder %s229, 1
                  %s234 = sphi %s137, %s137
                  %s235 = sphi %s134, %s134
                $region61: #{snn_forward_arrays.4} parent=50 // loop_header_branch
                  %232 = sbr.rel (%p230) target = $region65
                $region62: #{snn_forward_arrays.4} parent=50 // loop_body
                  %v236 = vld [vmem:[%s234] sm:$0xf]
                  %237 = vst [vmem:[%s235] sm:$0xf] %v236
                  %v238 = vld [vmem:[%s234 + $0x4] sm:$0xf]
                  %239 = vst [vmem:[%s235 + $0x4] sm:$0xf] %v238
                  %v240 = vld [vmem:[%s234 + $0x8] sm:$0xf]
                  %241 = vst [vmem:[%s235 + $0x8] sm:$0xf] %v240
                  %v242 = vld [vmem:[%s234 + $0xc] sm:$0xf]
                  %243 = vst [vmem:[%s235 + $0xc] sm:$0xf] %v242
                  %v244 = vld [vmem:[%s234 + $0x10] sm:$0xf]
                  %245 = vst [vmem:[%s235 + $0x10] sm:$0xf] %v244
                  %v246 = vld [vmem:[%s234 + $0x14] sm:$0xf]
                  %247 = vst [vmem:[%s235 + $0x14] sm:$0xf] %v246
                  %v248 = vld [vmem:[%s234 + $0x18] sm:$0xf]
                  %249 = vst [vmem:[%s235 + $0x18] sm:$0xf] %v248
                  %v250 = vld [vmem:[%s234 + $0x1c] sm:$0xf]
                  %251 = vst [vmem:[%s235 + $0x1c] sm:$0xf] %v250
                  %v252 = vld [vmem:[%s234 + $0x40] sm:$0xf]
                  %253 = vst [vmem:[%s235 + $0x20] sm:$0xf] %v252
                  %v254 = vld [vmem:[%s234 + $0x44] sm:$0xf]
                  %255 = vst [vmem:[%s235 + $0x24] sm:$0xf] %v254
                  %v256 = vld [vmem:[%s234 + $0x48] sm:$0xf]
                  %257 = vst [vmem:[%s235 + $0x28] sm:$0xf] %v256
                  %v258 = vld [vmem:[%s234 + $0x4c] sm:$0xf]
                  %259 = vst [vmem:[%s235 + $0x2c] sm:$0xf] %v258
                  %v260 = vld [vmem:[%s234 + $0x50] sm:$0xf]
                  %261 = vst [vmem:[%s235 + $0x30] sm:$0xf] %v260
                  %v262 = vld [vmem:[%s234 + $0x54] sm:$0xf]
                  %263 = vst [vmem:[%s235 + $0x34] sm:$0xf] %v262
                  %v264 = vld [vmem:[%s234 + $0x58] sm:$0xf]
                  %265 = vst [vmem:[%s235 + $0x38] sm:$0xf] %v264
                  %v266 = vld [vmem:[%s234 + $0x5c] sm:$0xf]
                  %267 = vst [vmem:[%s235 + $0x3c] sm:$0xf] %v266
                  %v268 = vld [vmem:[%s234 + $0x80] sm:$0xf]
                  %269 = vst [vmem:[%s235 + $0x40] sm:$0xf] %v268
                  %v270 = vld [vmem:[%s234 + $0x84] sm:$0xf]
                  %271 = vst [vmem:[%s235 + $0x44] sm:$0xf] %v270
                  %v272 = vld [vmem:[%s234 + $0x88] sm:$0xf]
                  %273 = vst [vmem:[%s235 + $0x48] sm:$0xf] %v272
                  %v274 = vld [vmem:[%s234 + $0x8c] sm:$0xf]
                  %275 = vst [vmem:[%s235 + $0x4c] sm:$0xf] %v274
                  %v276 = vld [vmem:[%s234 + $0x90] sm:$0xf]
                  %277 = vst [vmem:[%s235 + $0x50] sm:$0xf] %v276
                  %v278 = vld [vmem:[%s234 + $0x94] sm:$0xf]
                  %279 = vst [vmem:[%s235 + $0x54] sm:$0xf] %v278
                  %v280 = vld [vmem:[%s234 + $0x98] sm:$0xf]
                  %281 = vst [vmem:[%s235 + $0x58] sm:$0xf] %v280
                  %v282 = vld [vmem:[%s234 + $0x9c] sm:$0xf]
                  %283 = vst [vmem:[%s235 + $0x5c] sm:$0xf] %v282
                  %v284 = vld [vmem:[%s234 + $0xc0] sm:$0xf]
                  %285 = vst [vmem:[%s235 + $0x60] sm:$0xf] %v284
                  %v286 = vld [vmem:[%s234 + $0xc4] sm:$0xf]
                  %287 = vst [vmem:[%s235 + $0x64] sm:$0xf] %v286
                  %v288 = vld [vmem:[%s234 + $0xc8] sm:$0xf]
                  %289 = vst [vmem:[%s235 + $0x68] sm:$0xf] %v288
                  %v290 = vld [vmem:[%s234 + $0xcc] sm:$0xf]
                  %291 = vst [vmem:[%s235 + $0x6c] sm:$0xf] %v290
                  %v292 = vld [vmem:[%s234 + $0xd0] sm:$0xf]
                  %293 = vst [vmem:[%s235 + $0x70] sm:$0xf] %v292
                  %v294 = vld [vmem:[%s234 + $0xd4] sm:$0xf]
                  %295 = vst [vmem:[%s235 + $0x74] sm:$0xf] %v294
                  %v296 = vld [vmem:[%s234 + $0xd8] sm:$0xf]
                  %297 = vst [vmem:[%s235 + $0x78] sm:$0xf] %v296
                  %v298 = vld [vmem:[%s234 + $0xdc] sm:$0xf]
                  %299 = vst [vmem:[%s235 + $0x7c] sm:$0xf] %v298
                $region63: #{snn_forward_arrays.4} parent=50 // loop_footer
                  %s233 = sadd.s32 1, %s229
                $region64: #{snn_forward_arrays.4} parent=50 // loop_footer_branch
                  %228 = sbr.rel target = $region60
                $region65: #{snn_forward_arrays.4} parent=50 // loop_exit
                  _
              $region51: #{snn_forward_arrays.4} parent=35 // pred_fallthru
                _
            $region36: #{snn_forward_arrays.4} parent=31 // pred_fallthru
              _
            // Predicated region
            $region37: #{snn_forward_arrays.4} parent=31 // pred_check
              _
            $region38: #{snn_forward_arrays.4} parent=31 // pred_check_branch
              %143 = sbr.rel (0) target = $region40
            $region39: #{snn_forward_arrays.4} parent=31 // pred_region
              loop: start=0, step=1, limit=1
              $region41: #{snn_forward_arrays.4} parent=39 // loop_pre_header
                _
              $region42: #{snn_forward_arrays.4} parent=39 // loop_header
                %s146 = sphi 0, %s150
                %p147 = scmp.ge.s32.totalorder %s146, 1
                %s151 = sphi %s137, %s137
                %s152 = sphi %s134, %s134
              $region43: #{snn_forward_arrays.4} parent=39 // loop_header_branch
                %149 = sbr.rel (%p147) target = $region47
              $region44: #{snn_forward_arrays.4} parent=39 // loop_body
                %v153 = vld [vmem:[%s151] sm:$0xf]
                %154 = vst [vmem:[%s152] sm:$0xf] %v153
                %v155 = vld [vmem:[%s151 + $0x4] sm:$0xf]
                %156 = vst [vmem:[%s152 + $0x4] sm:$0xf] %v155
                %v157 = vld [vmem:[%s151 + $0x8] sm:$0xf]
                %158 = vst [vmem:[%s152 + $0x8] sm:$0xf] %v157
                %v159 = vld [vmem:[%s151 + $0xc] sm:$0xf]
                %160 = vst [vmem:[%s152 + $0xc] sm:$0xf] %v159
                %v161 = vld [vmem:[%s151 + $0x10] sm:$0xf]
                %162 = vst [vmem:[%s152 + $0x10] sm:$0xf] %v161
                %v163 = vld [vmem:[%s151 + $0x14] sm:$0xf]
                %164 = vst [vmem:[%s152 + $0x14] sm:$0xf] %v163
                %v165 = vld [vmem:[%s151 + $0x18] sm:$0xf]
                %166 = vst [vmem:[%s152 + $0x18] sm:$0xf] %v165
                %v167 = vld [vmem:[%s151 + $0x1c] sm:$0xf]
                %168 = vst [vmem:[%s152 + $0x1c] sm:$0xf] %v167
                %v169 = vld [vmem:[%s151 + $0x40] sm:$0xf]
                %170 = vst [vmem:[%s152 + $0x20] sm:$0xf] %v169
                %v171 = vld [vmem:[%s151 + $0x44] sm:$0xf]
                %172 = vst [vmem:[%s152 + $0x24] sm:$0xf] %v171
                %v173 = vld [vmem:[%s151 + $0x48] sm:$0xf]
                %174 = vst [vmem:[%s152 + $0x28] sm:$0xf] %v173
                %v175 = vld [vmem:[%s151 + $0x4c] sm:$0xf]
                %176 = vst [vmem:[%s152 + $0x2c] sm:$0xf] %v175
                %v177 = vld [vmem:[%s151 + $0x50] sm:$0xf]
                %178 = vst [vmem:[%s152 + $0x30] sm:$0xf] %v177
                %v179 = vld [vmem:[%s151 + $0x54] sm:$0xf]
                %180 = vst [vmem:[%s152 + $0x34] sm:$0xf] %v179
                %v181 = vld [vmem:[%s151 + $0x58] sm:$0xf]
                %182 = vst [vmem:[%s152 + $0x38] sm:$0xf] %v181
                %v183 = vld [vmem:[%s151 + $0x5c] sm:$0xf]
                %184 = vst [vmem:[%s152 + $0x3c] sm:$0xf] %v183
                %v185 = vld [vmem:[%s151 + $0x80] sm:$0xf]
                %186 = vst [vmem:[%s152 + $0x40] sm:$0xf] %v185
                %v187 = vld [vmem:[%s151 + $0x84] sm:$0xf]
                %188 = vst [vmem:[%s152 + $0x44] sm:$0xf] %v187
                %v189 = vld [vmem:[%s151 + $0x88] sm:$0xf]
                %190 = vst [vmem:[%s152 + $0x48] sm:$0xf] %v189
                %v191 = vld [vmem:[%s151 + $0x8c] sm:$0xf]
                %192 = vst [vmem:[%s152 + $0x4c] sm:$0xf] %v191
                %v193 = vld [vmem:[%s151 + $0x90] sm:$0xf]
                %194 = vst [vmem:[%s152 + $0x50] sm:$0xf] %v193
                %v195 = vld [vmem:[%s151 + $0x94] sm:$0xf]
                %196 = vst [vmem:[%s152 + $0x54] sm:$0xf] %v195
                %v197 = vld [vmem:[%s151 + $0x98] sm:$0xf]
                %198 = vst [vmem:[%s152 + $0x58] sm:$0xf] %v197
                %v199 = vld [vmem:[%s151 + $0x9c] sm:$0xf]
                %200 = vst [vmem:[%s152 + $0x5c] sm:$0xf] %v199
                %v201 = vld [vmem:[%s151 + $0xc0] sm:$0xf]
                %202 = vst [vmem:[%s152 + $0x60] sm:$0xf] %v201
                %v203 = vld [vmem:[%s151 + $0xc4] sm:$0xf]
                %204 = vst [vmem:[%s152 + $0x64] sm:$0xf] %v203
                %v205 = vld [vmem:[%s151 + $0xc8] sm:$0xf]
                %206 = vst [vmem:[%s152 + $0x68] sm:$0xf] %v205
                %v207 = vld [vmem:[%s151 + $0xcc] sm:$0xf]
                %208 = vst [vmem:[%s152 + $0x6c] sm:$0xf] %v207
                %v209 = vld [vmem:[%s151 + $0xd0] sm:$0xf]
                %210 = vst [vmem:[%s152 + $0x70] sm:$0xf] %v209
                %v211 = vld [vmem:[%s151 + $0xd4] sm:$0xf]
                %212 = vst [vmem:[%s152 + $0x74] sm:$0xf] %v211
                %v213 = vld [vmem:[%s151 + $0xd8] sm:$0xf]
                %214 = vst [vmem:[%s152 + $0x78] sm:$0xf] %v213
                %v215 = vld [vmem:[%s151 + $0xdc] sm:$0xf]
                %216 = vst [vmem:[%s152 + $0x7c] sm:$0xf] %v215
              $region45: #{snn_forward_arrays.4} parent=39 // loop_footer
                %s150 = sadd.s32 1, %s146
              $region46: #{snn_forward_arrays.4} parent=39 // loop_footer_branch
                %145 = sbr.rel target = $region42
              $region47: #{snn_forward_arrays.4} parent=39 // loop_exit
                _
            $region40: #{snn_forward_arrays.4} parent=31 // pred_fallthru
              _
          $region32: #{snn_forward_arrays.4} parent=27 // pred_fallthru
            _
          %300 = vnop
        $region28: #{snn_forward_arrays.4} parent=23 // pred_fallthru
          _
      $region24: #{snn_forward_arrays.4} parent=5 // pred_fallthru
        _
      %p301 = scmp.le.s32.totalorder 1, %s9
      %p302 = scmp.lt.s32.totalorder %s9, 3
      %p303 = pnand %p301, %p302
      %p304 = pneg %p303
      // Predicated region
      $region66: #{snn_forward_arrays.4} parent=5 // pred_check
        _
      $region67: #{snn_forward_arrays.4} parent=5 // pred_check_branch
        %306 = sbr.rel (%p303) target = $region69
      $region68: #{snn_forward_arrays.4} parent=5 // pred_region
        %s307 = ssub.s32 %s9, 1
        %s308 = sand.u32 %s22, 1
        %s309 = sand.u32 %s22, 1
        %s310 = smul.addr %s309, 128
        %s311 = scalar_lea.vmem [#allocation2], %s310
        // Predicated region
        $region70: #{snn_forward_arrays.4} parent=68 // pred_check
          %p312 = pneg %p35
        $region71: #{snn_forward_arrays.4} parent=68 // pred_check_branch
          %314 = sbr.rel (%p312) target = $region73
        $region72: #{snn_forward_arrays.4} parent=68 // pred_region
          _
        $region73: #{snn_forward_arrays.4} parent=68 // pred_fallthru
          _
        %s315 = sand.u32 %s22, 1
        %s316 = sand.u32 %s22, 1
        %s317 = smul.addr %s316, 128
        %s318 = scalar_lea.vmem [#allocation2], %s317
        %p319 = pneg %p35
        %p320 = pneg %p32
        %p321 = pneg %p56
        %p322 = pneg %p53
        %p323 = pneg %p77
        %p324 = pneg %p74
        %p325 = pneg %p103
        %p326 = pneg %p100
        %s327 = smul.u32 8, %s14
        %p328 = scmp.lt.s32.totalorder %s327, 15
        %s329 = scalar_select %p328, %s327, 15
        %s330 = smul.addr %s329, 4
        %s331 = scalar_lea.vmem %s3, %s330
        %s332 = smul.u32 8, %s14
        %s333 = smul.u32 8, %s14
        %p334 = scmp.lt.s32.totalorder %s333, 15
        %s335 = scalar_select %p334, %s333, 15
        %s336 = smul.addr %s335, 4
        %s337 = scalar_lea.vmem %s3, %s336
        %s338 = smul.u32 8, %s14
        %v340 = vld [vmem:[%s311] sm:$0xf]
        %v341 = vld [vmem:[%s311 + $0x4] sm:$0xf]
        %v342 = vld [vmem:[%s311 + $0x8] sm:$0xf]
        %v343 = vld [vmem:[%s311 + $0xc] sm:$0xf]
        %v344 = vld [vmem:[%s311 + $0x10] sm:$0xf]
        %v345 = vld [vmem:[%s311 + $0x14] sm:$0xf]
        %v346 = vld [vmem:[%s311 + $0x18] sm:$0xf]
        %v347 = vld [vmem:[%s311 + $0x1c] sm:$0xf]
        %v348 = vld [vmem:[%s311 + $0x20] sm:$0xf]
        %v349 = vld [vmem:[%s311 + $0x24] sm:$0xf]
        %v350 = vld [vmem:[%s311 + $0x28] sm:$0xf]
        %v351 = vld [vmem:[%s311 + $0x2c] sm:$0xf]
        %v352 = vld [vmem:[%s311 + $0x30] sm:$0xf]
        %v353 = vld [vmem:[%s311 + $0x34] sm:$0xf]
        %v354 = vld [vmem:[%s311 + $0x38] sm:$0xf]
        %v355 = vld [vmem:[%s311 + $0x3c] sm:$0xf]
        %v356 = vld [vmem:[%s311 + $0x40] sm:$0xf]
        %v357 = vld [vmem:[%s311 + $0x44] sm:$0xf]
        %v358 = vld [vmem:[%s311 + $0x48] sm:$0xf]
        %v359 = vld [vmem:[%s311 + $0x4c] sm:$0xf]
        %v360 = vld [vmem:[%s311 + $0x50] sm:$0xf]
        %v361 = vld [vmem:[%s311 + $0x54] sm:$0xf]
        %v362 = vld [vmem:[%s311 + $0x58] sm:$0xf]
        %v363 = vld [vmem:[%s311 + $0x5c] sm:$0xf]
        %v364 = vld [vmem:[%s311 + $0x60] sm:$0xf]
        %v365 = vld [vmem:[%s311 + $0x64] sm:$0xf]
        %v366 = vld [vmem:[%s311 + $0x68] sm:$0xf]
        %v367 = vld [vmem:[%s311 + $0x6c] sm:$0xf]
        %v368 = vld [vmem:[%s311 + $0x70] sm:$0xf]
        %v369 = vld [vmem:[%s311 + $0x74] sm:$0xf]
        %v370 = vld [vmem:[%s311 + $0x78] sm:$0xf]
        %v371 = vld [vmem:[%s311 + $0x7c] sm:$0xf]
        %v372 = vld [vmem:[%s1] sm:$0xf]
        %v373 = vld [vmem:[%s1 + $0x4] sm:$0xf]
        %v374 = vld [vmem:[%s1 + $0x8] sm:$0xf]
        %v375 = vld [vmem:[%s1 + $0xc] sm:$0x3]
        %v408 = vunpack.c.l.b16 %v340
        %v409 = vunpack.c.l.b16 %v341
        %v410 = vunpack.c.l.b16 %v342
        %v411 = vunpack.c.l.b16 %v343
        %v412 = vunpack.c.l.b16 %v344
        %v413 = vunpack.c.l.b16 %v345
        %v414 = vunpack.c.l.b16 %v346
        %v415 = vunpack.c.l.b16 %v347
        %v416 = vunpack.c.l.b16 %v348
        %v417 = vunpack.c.l.b16 %v349
        %v418 = vunpack.c.l.b16 %v350
        %v419 = vunpack.c.l.b16 %v351
        %v420 = vunpack.c.l.b16 %v352
        %v421 = vunpack.c.l.b16 %v353
        %v422 = vunpack.c.l.b16 %v354
        %v423 = vunpack.c.l.b16 %v355
        %v424 = vunpack.c.l.b16 %v356
        %v425 = vunpack.c.l.b16 %v357
        %v426 = vunpack.c.l.b16 %v358
        %v427 = vunpack.c.l.b16 %v359
        %v428 = vunpack.c.l.b16 %v360
        %v429 = vunpack.c.l.b16 %v361
        %v430 = vunpack.c.l.b16 %v362
        %v431 = vunpack.c.l.b16 %v363
        %v432 = vunpack.c.l.b16 %v364
        %v433 = vunpack.c.l.b16 %v365
        %v434 = vunpack.c.l.b16 %v366
        %v435 = vunpack.c.l.b16 %v367
        %v436 = vunpack.c.l.b16 %v368
        %v437 = vunpack.c.l.b16 %v369
        %v438 = vunpack.c.l.b16 %v370
        %v439 = vunpack.c.l.b16 %v371
        %v440 = vpack.c.b16 %v409, %v408
        %v441 = vpack.c.b16 %v411, %v410
        %v442 = vpack.c.b16 %v413, %v412
        %v443 = vpack.c.b16 %v415, %v414
        %v444 = vpack.c.b16 %v417, %v416
        %v445 = vpack.c.b16 %v419, %v418
        %v446 = vpack.c.b16 %v421, %v420
        %v447 = vpack.c.b16 %v423, %v422
        %v448 = vpack.c.b16 %v425, %v424
        %v449 = vpack.c.b16 %v427, %v426
        %v450 = vpack.c.b16 %v429, %v428
        %v451 = vpack.c.b16 %v431, %v430
        %v452 = vpack.c.b16 %v433, %v432
        %v453 = vpack.c.b16 %v435, %v434
        %v454 = vpack.c.b16 %v437, %v436
        %v455 = vpack.c.b16 %v439, %v438
        %v460 = vunpack.c.l.b16 %v372
        %v461 = vunpack.c.l.b16 %v373
        %v462 = vunpack.c.l.b16 %v374
        %v463 = vunpack.c.l.b16 %v375
        %v464 = vpack.c.b16 %v461, %v460
        %v465 = vpack.c.b16 %v463, %v462
        %vm467 = vcmask 220160
        %v469 = vsel %vm467, %v440, 0
        %v472 = vsel %vm467, %v441, 0
        %v475 = vsel %vm467, %v442, 0
        %v478 = vsel %vm467, %v443, 0
        %v481 = vsel %vm467, %v444, 0
        %v484 = vsel %vm467, %v445, 0
        %v487 = vsel %vm467, %v446, 0
        %v490 = vsel %vm467, %v447, 0
        %v493 = vsel %vm467, %v448, 0
        %v496 = vsel %vm467, %v449, 0
        %v499 = vsel %vm467, %v450, 0
        %v502 = vsel %vm467, %v451, 0
        %v505 = vsel %vm467, %v452, 0
        %v508 = vsel %vm467, %v453, 0
        %v511 = vsel %vm467, %v454, 0
        %v514 = vsel %vm467, %v455, 0
        %vm516 = vcmask 1044480
        %vm517 = vcmask 1045504
        %v518 = vsel %vm516, 4294967295, 65535
        %v519 = vsel %vm517, %v518, 0
        %v521 = vand.u32 %v465, %v519
        %523 = vmatprep.subr.bf16.mxu0 0
        %524 = vmatpush1.bf16.msra.mxu0 %v464
        %525 = vmatprep.subr.bf16.mxu0 0
        %526 = vmatpush1.bf16.msra.mxu0 %v521
        %527 = vmatprep.subr.bf16.mxu0 0
        %528 = vmatpush1.bf16.msra.mxu0 0
        %529 = vmatprep.subr.bf16.mxu0 0
        %530 = vmatpush1.bf16.msra.mxu0 0
        %531 = vmatprep.subr.bf16.mxu0 0
        %532 = vmatpush1.bf16.msra.mxu0 0
        %533 = vmatprep.subr.bf16.mxu0 0
        %534 = vmatpush1.bf16.msra.mxu0 0
        %535 = vmatprep.subr.bf16.mxu0 0
        %536 = vmatpush1.bf16.msra.mxu0 0
        %537 = vmatprep.subr.bf16.mxu0 0
        %538 = vmatpush1.bf16.msra.mxu0 0
        %539 = vmatprep.subr.bf16.mxu0 0
        %540 = vmatpush1.bf16.msra.mxu0 0
        %541 = vmatprep.subr.bf16.mxu0 0
        %542 = vmatpush1.bf16.msra.mxu0 0
        %543 = vmatprep.subr.bf16.mxu0 0
        %544 = vmatpush1.bf16.msra.mxu0 0
        %545 = vmatprep.subr.bf16.mxu0 0
        %546 = vmatpush1.bf16.msra.mxu0 0
        %547 = vmatprep.subr.bf16.mxu0 0
        %548 = vmatpush1.bf16.msra.mxu0 0
        %549 = vmatprep.subr.bf16.mxu0 0
        %550 = vmatpush1.bf16.msra.mxu0 0
        %551 = vmatprep.subr.bf16.mxu0 0
        %552 = vmatpush1.bf16.msra.mxu0 0
        %553 = vmatprep.subr.bf16.mxu0 0
        %554 = vmatpush1.bf16.msra.mxu0 0
        %555 = vmatprep.mubr.bf16.mxu0 0
        %556 = vmatmul.mubr.bf16.gmra.mrb[0].mxu0 %v469
        %v557 = vpop.f32.mrb[0].mxu0
        %v558 = vadd.f32 0.0, %v557
        %v559 = vpop.f32.mrb[0].mxu0
        %v560 = vpop.f32.mrb[0].mxu0
        %v561 = vadd.f32 0.0, %v560
        %v562 = vpop.f32.mrb[0].mxu0
        %563 = vmatprep.mubr.bf16.mxu0 0
        %564 = vmatmul.mubr.bf16.gmra.mrb[0].mxu0 %v472
        %v565 = vpop.f32.mrb[0].mxu0
        %v566 = vadd.f32 0.0, %v565
        %v567 = vpop.f32.mrb[0].mxu0
        %v568 = vpop.f32.mrb[0].mxu0
        %v569 = vadd.f32 0.0, %v568
        %v570 = vpop.f32.mrb[0].mxu0
        %571 = vmatprep.mubr.bf16.mxu0 0
        %572 = vmatmul.mubr.bf16.gmra.mrb[0].mxu0 %v475
        %v573 = vpop.f32.mrb[0].mxu0
        %v574 = vadd.f32 0.0, %v573
        %v575 = vpop.f32.mrb[0].mxu0
        %v576 = vpop.f32.mrb[0].mxu0
        %v577 = vadd.f32 0.0, %v576
        %v578 = vpop.f32.mrb[0].mxu0
        %579 = vmatprep.mubr.bf16.mxu0 0
        %580 = vmatmul.mubr.bf16.gmra.mrb[0].mxu0 %v478
        %v581 = vpop.f32.mrb[0].mxu0
        %v582 = vadd.f32 0.0, %v581
        %v583 = vpop.f32.mrb[0].mxu0
        %v584 = vpop.f32.mrb[0].mxu0
        %v585 = vadd.f32 0.0, %v584
        %v586 = vpop.f32.mrb[0].mxu0
        %587 = vmatprep.mubr.bf16.mxu0 0
        %588 = vmatmul.mubr.bf16.gmra.mrb[0].mxu0 %v481
        %v589 = vpop.f32.mrb[0].mxu0
        %v590 = vadd.f32 0.0, %v589
        %v591 = vpop.f32.mrb[0].mxu0
        %v592 = vpop.f32.mrb[0].mxu0
        %v593 = vadd.f32 0.0, %v592
        %v594 = vpop.f32.mrb[0].mxu0
        %595 = vmatprep.mubr.bf16.mxu0 0
        %596 = vmatmul.mubr.bf16.gmra.mrb[0].mxu0 %v484
        %v597 = vpop.f32.mrb[0].mxu0
        %v598 = vadd.f32 0.0, %v597
        %v599 = vpop.f32.mrb[0].mxu0
        %v600 = vpop.f32.mrb[0].mxu0
        %v601 = vadd.f32 0.0, %v600
        %v602 = vpop.f32.mrb[0].mxu0
        %603 = vmatprep.mubr.bf16.mxu0 0
        %604 = vmatmul.mubr.bf16.gmra.mrb[0].mxu0 %v487
        %v605 = vpop.f32.mrb[0].mxu0
        %v606 = vadd.f32 0.0, %v605
        %v607 = vpop.f32.mrb[0].mxu0
        %v608 = vpop.f32.mrb[0].mxu0
        %v609 = vadd.f32 0.0, %v608
        %v610 = vpop.f32.mrb[0].mxu0
        %611 = vmatprep.mubr.bf16.mxu0 0
        %612 = vmatmul.mubr.bf16.gmra.mrb[0].mxu0 %v490
        %v613 = vpop.f32.mrb[0].mxu0
        %v614 = vadd.f32 0.0, %v613
        %v615 = vpop.f32.mrb[0].mxu0
        %v616 = vpop.f32.mrb[0].mxu0
        %v617 = vadd.f32 0.0, %v616
        %v618 = vpop.f32.mrb[0].mxu0
        %619 = vmatprep.mubr.bf16.mxu0 0
        %620 = vmatmul.mubr.bf16.gmra.mrb[0].mxu0 %v493
        %v621 = vpop.f32.mrb[0].mxu0
        %v622 = vadd.f32 0.0, %v621
        %v623 = vpop.f32.mrb[0].mxu0
        %v624 = vpop.f32.mrb[0].mxu0
        %v625 = vadd.f32 0.0, %v624
        %v626 = vpop.f32.mrb[0].mxu0
        %627 = vmatprep.mubr.bf16.mxu0 0
        %628 = vmatmul.mubr.bf16.gmra.mrb[0].mxu0 %v496
        %v629 = vpop.f32.mrb[0].mxu0
        %v630 = vadd.f32 0.0, %v629
        %v631 = vpop.f32.mrb[0].mxu0
        %v632 = vpop.f32.mrb[0].mxu0
        %v633 = vadd.f32 0.0, %v632
        %v634 = vpop.f32.mrb[0].mxu0
        %635 = vmatprep.mubr.bf16.mxu0 0
        %636 = vmatmul.mubr.bf16.gmra.mrb[0].mxu0 %v499
        %v637 = vpop.f32.mrb[0].mxu0
        %v638 = vadd.f32 0.0, %v637
        %v639 = vpop.f32.mrb[0].mxu0
        %v640 = vpop.f32.mrb[0].mxu0
        %v641 = vadd.f32 0.0, %v640
        %v642 = vpop.f32.mrb[0].mxu0
        %643 = vmatprep.mubr.bf16.mxu0 0
        %644 = vmatmul.mubr.bf16.gmra.mrb[0].mxu0 %v502
        %v645 = vpop.f32.mrb[0].mxu0
        %v646 = vadd.f32 0.0, %v645
        %v647 = vpop.f32.mrb[0].mxu0
        %v648 = vpop.f32.mrb[0].mxu0
        %v649 = vadd.f32 0.0, %v648
        %v650 = vpop.f32.mrb[0].mxu0
        %651 = vmatprep.mubr.bf16.mxu0 0
        %652 = vmatmul.mubr.bf16.gmra.mrb[0].mxu0 %v505
        %v653 = vpop.f32.mrb[0].mxu0
        %v654 = vadd.f32 0.0, %v653
        %v655 = vpop.f32.mrb[0].mxu0
        %v656 = vpop.f32.mrb[0].mxu0
        %v657 = vadd.f32 0.0, %v656
        %v658 = vpop.f32.mrb[0].mxu0
        %659 = vmatprep.mubr.bf16.mxu0 0
        %660 = vmatmul.mubr.bf16.gmra.mrb[0].mxu0 %v508
        %v661 = vpop.f32.mrb[0].mxu0
        %v662 = vadd.f32 0.0, %v661
        %v663 = vpop.f32.mrb[0].mxu0
        %v664 = vpop.f32.mrb[0].mxu0
        %v665 = vadd.f32 0.0, %v664
        %v666 = vpop.f32.mrb[0].mxu0
        %667 = vmatprep.mubr.bf16.mxu0 0
        %668 = vmatmul.mubr.bf16.gmra.mrb[0].mxu0 %v511
        %v669 = vpop.f32.mrb[0].mxu0
        %v670 = vadd.f32 0.0, %v669
        %v671 = vpop.f32.mrb[0].mxu0
        %v672 = vpop.f32.mrb[0].mxu0
        %v673 = vadd.f32 0.0, %v672
        %v674 = vpop.f32.mrb[0].mxu0
        %675 = vmatprep.mubr.bf16.mxu0 0
        %676 = vmatmul.mubr.bf16.gmra.mrb[0].mxu0 %v514
        %v677 = vpop.f32.mrb[0].mxu0
        %v678 = vadd.f32 0.0, %v677
        %v679 = vpop.f32.mrb[0].mxu0
        %v680 = vpop.f32.mrb[0].mxu0
        %v681 = vadd.f32 0.0, %v680
        %v682 = vpop.f32.mrb[0].mxu0
        %683 = vdwg.mxu0
        %v684 = vmax.f32 %v558, %v590
        %v685 = vmax.f32 %v561, %v593
        %v686 = vmax.f32 %v566, %v598
        %v687 = vmax.f32 %v569, %v601
        %v688 = vmax.f32 %v574, %v606
        %v689 = vmax.f32 %v577, %v609
        %v690 = vmax.f32 %v582, %v614
        %v691 = vmax.f32 %v585, %v617
        %v692 = vmax.f32 %v684, %v622
        %v693 = vmax.f32 %v685, %v625
        %v694 = vmax.f32 %v686, %v630
        %v695 = vmax.f32 %v687, %v633
        %v696 = vmax.f32 %v688, %v638
        %v697 = vmax.f32 %v689, %v641
        %v698 = vmax.f32 %v690, %v646
        %v699 = vmax.f32 %v691, %v649
        %v700 = vmax.f32 %v692, %v654
        %v701 = vmax.f32 %v693, %v657
        %v702 = vmax.f32 %v694, %v662
        %v703 = vmax.f32 %v695, %v665
        %v704 = vmax.f32 %v696, %v670
        %v705 = vmax.f32 %v697, %v673
        %v706 = vmax.f32 %v698, %v678
        %v707 = vmax.f32 %v699, %v681
        %v708 = vld [vmem:[%s2] sm:$0x1]
        %v710 = vlaneseq
        %v711 = vshrl.u32 %v710, 7
        %v712 = vsub.s32 0, %v711
        %v713 = vrot.slane %v708, %v712
        %v715 = vadd.f32 %v700, %v713
        %v716 = vadd.f32 %v701, %v713
        %v717 = vadd.f32 %v702, %v713
        %v718 = vadd.f32 %v703, %v713
        %v719 = vadd.f32 %v704, %v713
        %v720 = vadd.f32 %v705, %v713
        %v721 = vadd.f32 %v706, %v713
        %v722 = vadd.f32 %v707, %v713
        %v723 = vmax.f32 %v715, 0.0
        %v724 = vmax.f32 %v716, 0.0
        %v725 = vmax.f32 %v717, 0.0
        %v726 = vmax.f32 %v718, 0.0
        %v727 = vmax.f32 %v719, 0.0
        %v728 = vmax.f32 %v720, 0.0
        %v729 = vmax.f32 %v721, 0.0
        %v730 = vmax.f32 %v722, 0.0
        %v731 = vpack.c.bf16 %v724, %v723
        %v732 = vpack.c.bf16 %v726, %v725
        %v733 = vpack.c.bf16 %v728, %v727
        %v734 = vpack.c.bf16 %v730, %v729
        %v739 = vunpack.c.l.b16 %v731
        %v740 = vunpack.c.h.b16 %v731
        %v741 = vunpack.c.l.b16 %v732
        %v742 = vunpack.c.h.b16 %v732
        %v743 = vunpack.c.l.b16 %v733
        %v744 = vunpack.c.h.b16 %v733
        %v745 = vunpack.c.l.b16 %v734
        %v746 = vunpack.c.h.b16 %v734
        %v747 = vpack.c.b16 %v739, %v739
        %v748 = vpack.c.b16 %v740, %v740
        %v749 = vpack.c.b16 %v741, %v741
        %v750 = vpack.c.b16 %v742, %v742
        %v751 = vpack.c.b16 %v743, %v743
        %v752 = vpack.c.b16 %v744, %v744
        %v753 = vpack.c.b16 %v745, %v745
        %v754 = vpack.c.b16 %v746, %v746
        %vm763 = vcmask 125952
        %764 = vst.msk [vmem:[%s337] sm:$0xf] %vm763, %v747
        %765 = vst.msk [vmem:[%s337 + $0x4] sm:$0xf] %vm763, %v748
        %766 = vst.msk [vmem:[%s337 + $0x8] sm:$0xf] %vm763, %v749
        %767 = vst.msk [vmem:[%s337 + $0xc] sm:$0xf] %vm763, %v750
        %768 = vst.msk [vmem:[%s337 + $0x10] sm:$0xf] %vm763, %v751
        %769 = vst.msk [vmem:[%s337 + $0x14] sm:$0xf] %vm763, %v752
        %770 = vst.msk [vmem:[%s337 + $0x18] sm:$0xf] %vm763, %v753
        %771 = vst.msk [vmem:[%s337 + $0x1c] sm:$0xf] %vm763, %v754
        %s772 = smul.u32 8, %s14
        %p773 = scmp.lt.s32.totalorder %s772, 15
        %s774 = scalar_select %p773, %s772, 15
        %s775 = smul.addr %s774, 4
        %s776 = scalar_lea.vmem %s3, %s775
        // Predicated region
        $region74: #{snn_forward_arrays.4} parent=68 // pred_check
          %p777 = pneg %p100
        $region75: #{snn_forward_arrays.4} parent=68 // pred_check_branch
          %779 = sbr.rel (%p777) target = $region77
        $region76: #{snn_forward_arrays.4} parent=68 // pred_region
          %s780 = smul.u32 8, %s14
        $region77: #{snn_forward_arrays.4} parent=68 // pred_fallthru
          _
      $region69: #{snn_forward_arrays.4} parent=5 // pred_fallthru
        _
      %p781 = scmp.le.s32.totalorder 2, %s9
      // Predicated region
      $region78: #{snn_forward_arrays.4} parent=5 // pred_check
        %p782 = pneg %p781
      $region79: #{snn_forward_arrays.4} parent=5 // pred_check_branch
        %784 = sbr.rel (%p782) target = $region81
      $region80: #{snn_forward_arrays.4} parent=5 // pred_region
        %s785 = ssub.s32 %s9, 2
        // Predicated region
        $region82: #{snn_forward_arrays.4} parent=80 // pred_check
          %p786 = pneg %p106
        $region83: #{snn_forward_arrays.4} parent=80 // pred_check_branch
          %788 = sbr.rel (%p786) target = $region85
        $region84: #{snn_forward_arrays.4} parent=80 // pred_region
          %s789 = smul.u32 8, %s15
          %p790 = scmp.lt.s32.totalorder %s789, 15
          %s791 = scalar_select %p790, %s789, 15
          %s792 = smul.addr %s791, 4
          %s793 = scalar_lea.vmem %s3, %s792
        $region85: #{snn_forward_arrays.4} parent=80 // pred_fallthru
          _
      $region81: #{snn_forward_arrays.4} parent=5 // pred_fallthru
        _
    $region6: #{snn_forward_arrays.4} parent=1 // loop_footer
      %s13 = sadd.s32 1, %s9
    $region7: #{snn_forward_arrays.4} parent=1 // loop_footer_branch
      %8 = sbr.rel target = $region3
    $region8: #{snn_forward_arrays.4} parent=1 // loop_exit
      _

// kernel: snn_forward_arrays.5
$region0: #{snn_forward_arrays.5}
  #allocation0 [shape = 'u32[]', space=smem, size = 0x4, offset = 0x4, fixed_abs, tag = 'smem constant byte address 0x4 - core index']
  #allocation1 [shape = 'u32[144,128]{1,0:T(1,128)}', space=vmem, size = 0x12000, scoped, tag = 'internal scratch']
  %s0 = inlined_call_operand.vmem [shape: bf16[4,32,144], index: 0, kind: input, shape index: {}]
  %s1 = inlined_call_operand.vmem [shape: bf16[144,32], index: 1, kind: input, shape index: {}]
  %s2 = inlined_call_operand.vmem [shape: f32[1,32], index: 2, kind: input, shape index: {}]
  %s3 = inlined_call_operand.vmem [shape: bf16[32,32], index: 3, kind: output, shape index: {}]
  %s4 = sld [smem:[#allocation0]]
  $region83: #{snn_forward_arrays.5} parent=0
    _
  %s6 = ssub.s32 1, %s4
  %s7 = scalar_select 0, %s6, %s4
  $region1: #{snn_forward_arrays.5} parent=0
    #allocation2 [shape = 'u8[65536]{0}', space=vmem, size = 0x10000, scoped, tag = 'input window, operand 0']
    loop: start=0, step=1, limit=4
    $region2: #{snn_forward_arrays.5} parent=1 // loop_pre_header
      _
    $region3: #{snn_forward_arrays.5} parent=1 // loop_header
      %s9 = sphi 0, %s13
      %p10 = scmp.ge.s32.totalorder %s9, 4
      %s19 = sphi 0, %s21
      %s22 = sphi 0, %s19
      %s23 = sphi 0, %s22
      %s39 = sphi 0, %s23
      %s43 = sphi 0, %s43
      %s45 = sphi 0, %s43
      %s46 = sphi 0, %s45
      %s60 = sphi 0, %s46
      %s64 = sphi 0, %s64
      %s66 = sphi 0, %s64
      %s67 = sphi 0, %s66
      %s81 = sphi 0, %s67
      %s87 = sphi 0, %s89
      %s90 = sphi 0, %s87
      %s91 = sphi 0, %s90
      %s107 = sphi 0, %s91
    $region4: #{snn_forward_arrays.5} parent=1 // loop_header_branch
      %12 = sbr.rel (%p10) target = $region8
    $region5: #{snn_forward_arrays.5} parent=1 // loop_body
      %s14 = ssub.s32 %s9, 1
      %s15 = ssub.s32 %s9, 2
      %s16 = sadd.s32 %s9, 1
      %s17 = ssub.s32 %s9, %s16
      %p18 = scmp.eq.s32.totalorder %s17, 0
      %s20 = sadd.s32 %s19, 1
      %s21 = scalar_select %p18, %s19, %s20
      %p24 = pneg %p18
      %p25 = scmp.eq.s32.totalorder %s9, 1
      %p26 = por %p24, %p25
      %p27 = scmp.ne.s32.totalorder %s19, %s22
      %p28 = scmp.eq.s32.totalorder %s9, 0
      %p29 = por %p27, %p28
      %p30 = scmp.ne.s32.totalorder %s19, %s22
      %p31 = scmp.eq.s32.totalorder %s14, 1
      %p32 = por %p30, %p31
      %p33 = scmp.ne.s32.totalorder %s22, %s23
      %p34 = scmp.eq.s32.totalorder %s14, 0
      %p35 = por %p33, %p34
      %p36 = scmp.ne.s32.totalorder %s22, %s23
      %p37 = scmp.eq.s32.totalorder %s15, 1
      %p38 = por %p36, %p37
      %p40 = scmp.ne.s32.totalorder %s23, %s39
      %p41 = scmp.eq.s32.totalorder %s15, 0
      %p42 = por %p40, %p41
      %s44 = sadd.s32 %s43, 1
      %p47 = scmp.eq.s32.totalorder %s9, 1
      %p48 = scmp.ne.s32.totalorder %s43, %s45
      %p49 = scmp.eq.s32.totalorder %s9, 0
      %p50 = por %p48, %p49
      %p51 = scmp.ne.s32.totalorder %s43, %s45
      %p52 = scmp.eq.s32.totalorder %s14, 1
      %p53 = por %p51, %p52
      %p54 = scmp.ne.s32.totalorder %s45, %s46
      %p55 = scmp.eq.s32.totalorder %s14, 0
      %p56 = por %p54, %p55
      %p57 = scmp.ne.s32.totalorder %s45, %s46
      %p58 = scmp.eq.s32.totalorder %s15, 1
      %p59 = por %p57, %p58
      %p61 = scmp.ne.s32.totalorder %s46, %s60
      %p62 = scmp.eq.s32.totalorder %s15, 0
      %p63 = por %p61, %p62
      %s65 = sadd.s32 %s64, 1
      %p68 = scmp.eq.s32.totalorder %s9, 1
      %p69 = scmp.ne.s32.totalorder %s64, %s66
      %p70 = scmp.eq.s32.totalorder %s9, 0
      %p71 = por %p69, %p70
      %p72 = scmp.ne.s32.totalorder %s64, %s66
      %p73 = scmp.eq.s32.totalorder %s14, 1
      %p74 = por %p72, %p73
      %p75 = scmp.ne.s32.totalorder %s66, %s67
      %p76 = scmp.eq.s32.totalorder %s14, 0
      %p77 = por %p75, %p76
      %p78 = scmp.ne.s32.totalorder %s66, %s67
      %p79 = scmp.eq.s32.totalorder %s15, 1
      %p80 = por %p78, %p79
      %p82 = scmp.ne.s32.totalorder %s67, %s81
      %p83 = scmp.eq.s32.totalorder %s15, 0
      %p84 = por %p82, %p83
      %s85 = ssub.s32 %s9, %s16
      %p86 = scmp.eq.s32.totalorder %s85, 0
      %s88 = sadd.s32 %s87, 1
      %s89 = scalar_select %p86, %s87, %s88
      %p92 = pneg %p86
      %p93 = scmp.eq.s32.totalorder %s9, 1
      %p94 = por %p92, %p93
      %p95 = scmp.ne.s32.totalorder %s87, %s90
      %p96 = scmp.eq.s32.totalorder %s9, 0
      %p97 = por %p95, %p96
      %p98 = scmp.ne.s32.totalorder %s87, %s90
      %p99 = scmp.eq.s32.totalorder %s14, 1
      %p100 = por %p98, %p99
      %p101 = scmp.ne.s32.totalorder %s90, %s91
      %p102 = scmp.eq.s32.totalorder %s14, 0
      %p103 = por %p101, %p102
      %p104 = scmp.ne.s32.totalorder %s90, %s91
      %p105 = scmp.eq.s32.totalorder %s15, 1
      %p106 = por %p104, %p105
      %p108 = scmp.ne.s32.totalorder %s91, %s107
      %p109 = scmp.eq.s32.totalorder %s15, 0
      %p110 = por %p108, %p109
      %p111 = scmp.le.s32.totalorder 1, %s9
      %p112 = scmp.lt.s32.totalorder %s9, 3
      %p113 = pnand %p111, %p112
      %p114 = pneg %p113
      // Predicated region
      $region9: #{snn_forward_arrays.5} parent=5 // pred_check
        _
      $region10: #{snn_forward_arrays.5} parent=5 // pred_check_branch
        %116 = sbr.rel (%p113) target = $region12
      $region11: #{snn_forward_arrays.5} parent=5 // pred_region
        %s117 = ssub.s32 %s9, 1
        // Predicated region
        $region13: #{snn_forward_arrays.5} parent=11 // pred_check
          %p118 = pneg %p56
        $region14: #{snn_forward_arrays.5} parent=11 // pred_check_branch
          %120 = sbr.rel (%p118) target = $region16
        $region15: #{snn_forward_arrays.5} parent=11 // pred_region
          _
        $region16: #{snn_forward_arrays.5} parent=11 // pred_fallthru
          _
        // Predicated region
        $region17: #{snn_forward_arrays.5} parent=11 // pred_check
          %p121 = pneg %p77
        $region18: #{snn_forward_arrays.5} parent=11 // pred_check_branch
          %123 = sbr.rel (%p121) target = $region20
        $region19: #{snn_forward_arrays.5} parent=11 // pred_region
          _
        $region20: #{snn_forward_arrays.5} parent=11 // pred_fallthru
          _
      $region12: #{snn_forward_arrays.5} parent=5 // pred_fallthru
        _
      %p124 = scmp.lt.s32.totalorder %s9, 2
      // Predicated region
      $region21: #{snn_forward_arrays.5} parent=5 // pred_check
        %p125 = pneg %p124
      $region22: #{snn_forward_arrays.5} parent=5 // pred_check_branch
        %127 = sbr.rel (%p125) target = $region24
      $region23: #{snn_forward_arrays.5} parent=5 // pred_region
        // Predicated region
        $region25: #{snn_forward_arrays.5} parent=23 // pred_check
          %p128 = pneg %p29
        $region26: #{snn_forward_arrays.5} parent=23 // pred_check_branch
          %130 = sbr.rel (%p128) target = $region28
        $region27: #{snn_forward_arrays.5} parent=23 // pred_region
          %s131 = sand.u32 %s19, 1
          %s132 = sand.u32 %s19, 1
          %s133 = smul.addr %s132, 64
          %s134 = scalar_lea.vmem [#allocation2], %s133
          %s135 = smul.u32 2, %s9
          %s136 = smul.addr %s135, 2
          %s137 = smul.addr %s136, 4
          %s138 = scalar_lea.vmem %s0, %s137
          // Predicated region
          $region29: #{snn_forward_arrays.5} parent=27 // pred_check
            _
          $region30: #{snn_forward_arrays.5} parent=27 // pred_check_branch
            %140 = sbr.rel (0) target = $region32
          $region31: #{snn_forward_arrays.5} parent=27 // pred_region
            // Predicated region
            $region33: #{snn_forward_arrays.5} parent=31 // pred_check
              _
            $region34: #{snn_forward_arrays.5} parent=31 // pred_check_branch
              %142 = sbr.rel (0) target = $region36
            $region35: #{snn_forward_arrays.5} parent=31 // pred_region
              // Predicated region
              $region48: #{snn_forward_arrays.5} parent=35 // pred_check
                _
              $region49: #{snn_forward_arrays.5} parent=35 // pred_check_branch
                %171 = sbr.rel (0) target = $region51
              $region50: #{snn_forward_arrays.5} parent=35 // pred_region
                loop: start=0, step=1, limit=1
                $region52: #{snn_forward_arrays.5} parent=50 // loop_pre_header
                  _
                $region53: #{snn_forward_arrays.5} parent=50 // loop_header
                  %s173 = sphi 0, %s177
                  %p174 = scmp.ge.s32.totalorder %s173, 1
                  %s178 = sphi %s138, %s138
                  %s179 = sphi %s134, %s134
                $region54: #{snn_forward_arrays.5} parent=50 // loop_header_branch
                  %176 = sbr.rel (%p174) target = $region58
                $region55: #{snn_forward_arrays.5} parent=50 // loop_body
                  %v180 = vld [vmem:[%s178] sm:$0xff]
                  %181 = vst [vmem:[%s179] sm:$0xff] %v180
                  %v182 = vld [vmem:[%s178 + $0x8] sm:$0xff]
                  %183 = vst [vmem:[%s179 + $0x8] sm:$0xff] %v182
                  %v184 = vld [vmem:[%s178 + $0x20] sm:$0xff]
                  %185 = vst [vmem:[%s179 + $0x10] sm:$0xff] %v184
                  %v186 = vld [vmem:[%s178 + $0x28] sm:$0xff]
                  %187 = vst [vmem:[%s179 + $0x18] sm:$0xff] %v186
                  %v188 = vld [vmem:[%s178 + $0x40] sm:$0xff]
                  %189 = vst [vmem:[%s179 + $0x20] sm:$0xff] %v188
                  %v190 = vld [vmem:[%s178 + $0x48] sm:$0xff]
                  %191 = vst [vmem:[%s179 + $0x28] sm:$0xff] %v190
                  %v192 = vld [vmem:[%s178 + $0x60] sm:$0xff]
                  %193 = vst [vmem:[%s179 + $0x30] sm:$0xff] %v192
                  %v194 = vld [vmem:[%s178 + $0x68] sm:$0xff]
                  %195 = vst [vmem:[%s179 + $0x38] sm:$0xff] %v194
                $region56: #{snn_forward_arrays.5} parent=50 // loop_footer
                  %s177 = sadd.s32 1, %s173
                $region57: #{snn_forward_arrays.5} parent=50 // loop_footer_branch
                  %172 = sbr.rel target = $region53
                $region58: #{snn_forward_arrays.5} parent=50 // loop_exit
                  _
              $region51: #{snn_forward_arrays.5} parent=35 // pred_fallthru
                _
              // Predicated region
              $region59: #{snn_forward_arrays.5} parent=35 // pred_check
                _
              $region60: #{snn_forward_arrays.5} parent=35 // pred_check_branch
                %197 = sbr.rel target = $region62
              $region61: #{snn_forward_arrays.5} parent=35 // pred_region
                _
              $region62: #{snn_forward_arrays.5} parent=35 // pred_fallthru
                _
            $region36: #{snn_forward_arrays.5} parent=31 // pred_fallthru
              _
            // Predicated region
            $region37: #{snn_forward_arrays.5} parent=31 // pred_check
              _
            $region38: #{snn_forward_arrays.5} parent=31 // pred_check_branch
              %144 = sbr.rel target = $region40
            $region39: #{snn_forward_arrays.5} parent=31 // pred_region
              loop: start=0, step=1, limit=1
              $region41: #{snn_forward_arrays.5} parent=39 // loop_pre_header
                _
              $region42: #{snn_forward_arrays.5} parent=39 // loop_header
                %s147 = sphi 0, %s151
                %p148 = scmp.ge.s32.totalorder %s147, 1
                %s152 = sphi %s138, %s138
                %s153 = sphi %s134, %s134
              $region43: #{snn_forward_arrays.5} parent=39 // loop_header_branch
                %150 = sbr.rel (%p148) target = $region47
              $region44: #{snn_forward_arrays.5} parent=39 // loop_body
                %v154 = vld [vmem:[%s152] sm:$0xff]
                %155 = vst [vmem:[%s153] sm:$0xff] %v154
                %v156 = vld [vmem:[%s152 + $0x8] sm:$0xff]
                %157 = vst [vmem:[%s153 + $0x8] sm:$0xff] %v156
                %v158 = vld [vmem:[%s152 + $0x20] sm:$0xff]
                %159 = vst [vmem:[%s153 + $0x10] sm:$0xff] %v158
                %v160 = vld [vmem:[%s152 + $0x28] sm:$0xff]
                %161 = vst [vmem:[%s153 + $0x18] sm:$0xff] %v160
                %v162 = vld [vmem:[%s152 + $0x40] sm:$0xff]
                %163 = vst [vmem:[%s153 + $0x20] sm:$0xff] %v162
                %v164 = vld [vmem:[%s152 + $0x48] sm:$0xff]
                %165 = vst [vmem:[%s153 + $0x28] sm:$0xff] %v164
                %v166 = vld [vmem:[%s152 + $0x60] sm:$0xff]
                %167 = vst [vmem:[%s153 + $0x30] sm:$0xff] %v166
                %v168 = vld [vmem:[%s152 + $0x68] sm:$0xff]
                %169 = vst [vmem:[%s153 + $0x38] sm:$0xff] %v168
              $region45: #{snn_forward_arrays.5} parent=39 // loop_footer
                %s151 = sadd.s32 1, %s147
              $region46: #{snn_forward_arrays.5} parent=39 // loop_footer_branch
                %146 = sbr.rel target = $region42
              $region47: #{snn_forward_arrays.5} parent=39 // loop_exit
                _
            $region40: #{snn_forward_arrays.5} parent=31 // pred_fallthru
              _
          $region32: #{snn_forward_arrays.5} parent=27 // pred_fallthru
            _
          %198 = vnop
        $region28: #{snn_forward_arrays.5} parent=23 // pred_fallthru
          _
      $region24: #{snn_forward_arrays.5} parent=5 // pred_fallthru
        _
      %p199 = scmp.le.s32.totalorder 1, %s9
      %p200 = scmp.lt.s32.totalorder %s9, 3
      %p201 = pnand %p199, %p200
      %p202 = pneg %p201
      // Predicated region
      $region63: #{snn_forward_arrays.5} parent=5 // pred_check
        _
      $region64: #{snn_forward_arrays.5} parent=5 // pred_check_branch
        %204 = sbr.rel (%p201) target = $region66
      $region65: #{snn_forward_arrays.5} parent=5 // pred_region
        %s205 = ssub.s32 %s9, 1
        %s206 = sand.u32 %s22, 1
        %s207 = sand.u32 %s22, 1
        %s208 = smul.addr %s207, 64
        %s209 = scalar_lea.vmem [#allocation2], %s208
        // Predicated region
        $region67: #{snn_forward_arrays.5} parent=65 // pred_check
          %p210 = pneg %p35
        $region68: #{snn_forward_arrays.5} parent=65 // pred_check_branch
          %212 = sbr.rel (%p210) target = $region70
        $region69: #{snn_forward_arrays.5} parent=65 // pred_region
          _
        $region70: #{snn_forward_arrays.5} parent=65 // pred_fallthru
          _
        %s213 = sand.u32 %s22, 1
        %s214 = sand.u32 %s22, 1
        %s215 = smul.addr %s214, 64
        %s216 = scalar_lea.vmem [#allocation2], %s215
        %p217 = pneg %p35
        %p218 = pneg %p32
        %p219 = pneg %p56
        %p220 = pneg %p53
        %p221 = pneg %p77
        %p222 = pneg %p74
        %p223 = pneg %p103
        %p224 = pneg %p100
        %s225 = smul.u32 2, %s14
        %p226 = scmp.lt.s32.totalorder %s225, 3
        %s227 = scalar_select %p226, %s225, 3
        %s228 = smul.addr %s227, 4
        %s229 = scalar_lea.vmem %s3, %s228
        %s230 = smul.u32 2, %s14
        %s231 = smul.u32 2, %s14
        %p232 = scmp.lt.s32.totalorder %s231, 3
        %s233 = scalar_select %p232, %s231, 3
        %s234 = smul.addr %s233, 4
        %s235 = scalar_lea.vmem %s3, %s234
        %s236 = smul.u32 2, %s14
        %v238 = vld [vmem:[%s209] sm:$0xff]
        %v239 = vld [vmem:[%s209 + $0x8] sm:$0xff]
        %v240 = vld [vmem:[%s209 + $0x10] sm:$0xff]
        %v241 = vld [vmem:[%s209 + $0x18] sm:$0xff]
        %v242 = vld [vmem:[%s209 + $0x20] sm:$0xff]
        %v243 = vld [vmem:[%s209 + $0x28] sm:$0xff]
        %v244 = vld [vmem:[%s209 + $0x30] sm:$0xff]
        %v245 = vld [vmem:[%s209 + $0x38] sm:$0xff]
        %v246 = vld [vmem:[%s1] sm:$0xf]
        %v247 = vld [vmem:[%s1 + $0x4] sm:$0xf]
        %v248 = vld [vmem:[%s1 + $0x8] sm:$0xf]
        %v249 = vld [vmem:[%s1 + $0xc] sm:$0xf]
        %v250 = vld [vmem:[%s1 + $0x10] sm:$0xf]
        %v251 = vld [vmem:[%s1 + $0x14] sm:$0xf]
        %v252 = vld [vmem:[%s1 + $0x18] sm:$0xf]
        %v253 = vld [vmem:[%s1 + $0x1c] sm:$0xf]
        %v254 = vld [vmem:[%s1 + $0x20] sm:$0xf]
        %v255 = vld [vmem:[%s1 + $0x24] sm:$0xf]
        %v256 = vld [vmem:[%s1 + $0x28] sm:$0xf]
        %v257 = vld [vmem:[%s1 + $0x2c] sm:$0xf]
        %v258 = vld [vmem:[%s1 + $0x30] sm:$0xf]
        %v259 = vld [vmem:[%s1 + $0x34] sm:$0xf]
        %v260 = vld [vmem:[%s1 + $0x38] sm:$0xf]
        %v261 = vld [vmem:[%s1 + $0x3c] sm:$0xf]
        %v262 = vld [vmem:[%s1 + $0x40] sm:$0xf]
        %v263 = vld [vmem:[%s1 + $0x44] sm:$0xf]
        %v272 = vunpack.c.l.b16 %v238
        %v273 = vunpack.c.h.b16 %v238
        %v274 = vunpack.c.l.b16 %v239
        %v275 = vunpack.c.h.b16 %v239
        %v276 = vunpack.c.l.b16 %v240
        %v277 = vunpack.c.h.b16 %v240
        %v278 = vunpack.c.l.b16 %v241
        %v279 = vunpack.c.h.b16 %v241
        %v280 = vunpack.c.l.b16 %v242
        %v281 = vunpack.c.h.b16 %v242
        %v282 = vunpack.c.l.b16 %v243
        %v283 = vunpack.c.h.b16 %v243
        %v284 = vunpack.c.l.b16 %v244
        %v285 = vunpack.c.h.b16 %v244
        %v286 = vunpack.c.l.b16 %v245
        %v287 = vunpack.c.h.b16 %v245
        %v288 = vpack.c.b16 %v274, %v272
        %v289 = vpack.c.b16 %v275, %v273
        %v290 = vpack.c.b16 %v278, %v276
        %v291 = vpack.c.b16 %v279, %v277
        %v292 = vpack.c.b16 %v282, %v280
        %v293 = vpack.c.b16 %v283, %v281
        %v294 = vpack.c.b16 %v286, %v284
        %v295 = vpack.c.b16 %v287, %v285
        %v318 = vunpack.c.l.b16 %v246
        %v319 = vunpack.c.l.b16 %v247
        %v320 = vunpack.c.l.b16 %v248
        %v321 = vunpack.c.l.b16 %v249
        %v322 = vunpack.c.l.b16 %v250
        %v323 = vunpack.c.l.b16 %v251
        %v324 = vunpack.c.l.b16 %v252
        %v325 = vunpack.c.l.b16 %v253
        %v326 = vunpack.c.l.b16 %v254
        %v327 = vunpack.c.l.b16 %v255
        %v328 = vunpack.c.l.b16 %v256
        %v329 = vunpack.c.l.b16 %v257
        %v330 = vunpack.c.l.b16 %v258
        %v331 = vunpack.c.l.b16 %v259
        %v332 = vunpack.c.l.b16 %v260
        %v333 = vunpack.c.l.b16 %v261
        %v334 = vunpack.c.l.b16 %v262
        %v335 = vunpack.c.l.b16 %v263
        %v336 = vpack.c.b16 %v319, %v318
        %v337 = vpack.c.b16 %v321, %v320
        %v338 = vpack.c.b16 %v323, %v322
        %v339 = vpack.c.b16 %v325, %v324
        %v340 = vpack.c.b16 %v327, %v326
        %v341 = vpack.c.b16 %v329, %v328
        %v342 = vpack.c.b16 %v331, %v330
        %v343 = vpack.c.b16 %v333, %v332
        %v344 = vpack.c.b16 %v335, %v334
        %vm354 = vcmask 130048
        %v356 = vsel %vm354, %v289, 0
        %v359 = vsel %vm354, %v291, 0
        %v362 = vsel %vm354, %v293, 0
        %v365 = vsel %vm354, %v295, 0
        %367 = vmatprep.subr.bf16.mxu0 0
        %368 = vmatpush1.bf16.msra.mxu0 %v336
        %369 = vmatprep.subr.bf16.mxu0 0
        %370 = vmatpush1.bf16.msra.mxu0 %v337
        %371 = vmatprep.subr.bf16.mxu0 0
        %372 = vmatpush1.bf16.msra.mxu0 %v338
        %373 = vmatprep.subr.bf16.mxu0 0
        %374 = vmatpush1.bf16.msra.mxu0 %v339
        %375 = vmatprep.subr.bf16.mxu0 0
        %376 = vmatpush1.bf16.msra.mxu0 %v340
        %377 = vmatprep.subr.bf16.mxu0 0
        %378 = vmatpush1.bf16.msra.mxu0 %v341
        %379 = vmatprep.subr.bf16.mxu0 0
        %380 = vmatpush1.bf16.msra.mxu0 %v342
        %381 = vmatprep.subr.bf16.mxu0 0
        %382 = vmatpush1.bf16.msra.mxu0 %v343
        %383 = vmatprep.subr.bf16.mxu0 0
        %384 = vmatpush1.bf16.msra.mxu0 %v344
        %385 = vmatprep.subr.bf16.mxu0 0
        %386 = vmatpush1.bf16.msra.mxu0 0
        %387 = vmatprep.subr.bf16.mxu0 0
        %388 = vmatpush1.bf16.msra.mxu0 0
        %389 = vmatprep.subr.bf16.mxu0 0
        %390 = vmatpush1.bf16.msra.mxu0 0
        %391 = vmatprep.subr.bf16.mxu0 0
        %392 = vmatpush1.bf16.msra.mxu0 0
        %393 = vmatprep.subr.bf16.mxu0 0
        %394 = vmatpush1.bf16.msra.mxu0 0
        %395 = vmatprep.subr.bf16.mxu0 0
        %396 = vmatpush1.bf16.msra.mxu0 0
        %397 = vmatprep.subr.bf16.mxu0 0
        %398 = vmatpush1.bf16.msra.mxu0 0
        %399 = vmatprep.mubr.bf16.mxu0 %v356
        %400 = vmatmul.mubr.bf16.gmra.mrb[0].mxu0 %v288
        %v401 = vpop.f32.mrb[0].mxu0
        %v402 = vadd.f32 0.0, %v401
        %v403 = vpop.f32.mrb[0].mxu0
        %v404 = vpop.f32.mrb[0].mxu0
        %v405 = vadd.f32 0.0, %v404
        %v406 = vpop.f32.mrb[0].mxu0
        %407 = vmatprep.mubr.bf16.mxu0 %v359
        %408 = vmatmul.mubr.bf16.gmra.mrb[0].mxu0 %v290
        %v409 = vpop.f32.mrb[0].mxu0
        %v410 = vadd.f32 0.0, %v409
        %v411 = vpop.f32.mrb[0].mxu0
        %v412 = vpop.f32.mrb[0].mxu0
        %v413 = vadd.f32 0.0, %v412
        %v414 = vpop.f32.mrb[0].mxu0
        %415 = vmatprep.mubr.bf16.mxu0 %v362
        %416 = vmatmul.mubr.bf16.gmra.mrb[0].mxu0 %v292
        %v417 = vpop.f32.mrb[0].mxu0
        %v418 = vadd.f32 0.0, %v417
        %v419 = vpop.f32.mrb[0].mxu0
        %v420 = vpop.f32.mrb[0].mxu0
        %v421 = vadd.f32 0.0, %v420
        %v422 = vpop.f32.mrb[0].mxu0
        %423 = vmatprep.mubr.bf16.mxu0 %v365
        %424 = vmatmul.mubr.bf16.gmra.mrb[0].mxu0 %v294
        %v425 = vpop.f32.mrb[0].mxu0
        %v426 = vadd.f32 0.0, %v425
        %v427 = vpop.f32.mrb[0].mxu0
        %v428 = vpop.f32.mrb[0].mxu0
        %v429 = vadd.f32 0.0, %v428
        %v430 = vpop.f32.mrb[0].mxu0
        %431 = vdwg.mxu0
        %v432 = vmax.f32 %v402, %v410
        %v433 = vmax.f32 %v405, %v413
        %v434 = vmax.f32 %v432, %v418
        %v435 = vmax.f32 %v433, %v421
        %v436 = vmax.f32 %v434, %v426
        %v437 = vmax.f32 %v435, %v429
        %v438 = vld [vmem:[%s2] sm:$0x1]
        %v440 = vlaneseq
        %v441 = vshrl.u32 %v440, 7
        %v442 = vsub.s32 0, %v441
        %v443 = vrot.slane %v438, %v442
        %v445 = vadd.f32 %v436, %v443
        %v446 = vadd.f32 %v437, %v443
        %v447 = vmax.f32 %v445, 0.0
        %v448 = vmax.f32 %v446, 0.0
        %v449 = vpack.c.bf16 %v448, %v447
        %v451 = vunpack.c.l.b16 %v449
        %v452 = vunpack.c.h.b16 %v449
        %v453 = vpack.c.b16 %v451, %v451
        %v454 = vpack.c.b16 %v452, %v452
        %vm457 = vcmask 257024
        %458 = vst.msk [vmem:[%s235] sm:$0xf] %vm457, %v453
        %459 = vst.msk [vmem:[%s235 + $0x4] sm:$0xf] %vm457, %v454
        %s460 = smul.u32 2, %s14
        %p461 = scmp.lt.s32.totalorder %s460, 3
        %s462 = scalar_select %p461, %s460, 3
        %s463 = smul.addr %s462, 4
        %s464 = scalar_lea.vmem %s3, %s463
        // Predicated region
        $region71: #{snn_forward_arrays.5} parent=65 // pred_check
          %p465 = pneg %p100
        $region72: #{snn_forward_arrays.5} parent=65 // pred_check_branch
          %467 = sbr.rel (%p465) target = $region74
        $region73: #{snn_forward_arrays.5} parent=65 // pred_region
          %s468 = smul.u32 2, %s14
        $region74: #{snn_forward_arrays.5} parent=65 // pred_fallthru
          _
      $region66: #{snn_forward_arrays.5} parent=5 // pred_fallthru
        _
      %p469 = scmp.le.s32.totalorder 2, %s9
      // Predicated region
      $region75: #{snn_forward_arrays.5} parent=5 // pred_check
        %p470 = pneg %p469
      $region76: #{snn_forward_arrays.5} parent=5 // pred_check_branch
        %472 = sbr.rel (%p470) target = $region78
      $region77: #{snn_forward_arrays.5} parent=5 // pred_region
        %s473 = ssub.s32 %s9, 2
        // Predicated region
        $region79: #{snn_forward_arrays.5} parent=77 // pred_check
          %p474 = pneg %p106
        $region80: #{snn_forward_arrays.5} parent=77 // pred_check_branch
          %476 = sbr.rel (%p474) target = $region82
        $region81: #{snn_forward_arrays.5} parent=77 // pred_region
          %s477 = smul.u32 2, %s15
          %p478 = scmp.lt.s32.totalorder %s477, 3
          %s479 = scalar_select %p478, %s477, 3
          %s480 = smul.addr %s479, 4
          %s481 = scalar_lea.vmem %s3, %s480
        $region82: #{snn_forward_arrays.5} parent=77 // pred_fallthru
          _
      $region78: #{snn_forward_arrays.5} parent=5 // pred_fallthru
        _
    $region6: #{snn_forward_arrays.5} parent=1 // loop_footer
      %s13 = sadd.s32 1, %s9
    $region7: #{snn_forward_arrays.5} parent=1 // loop_footer_branch
      %8 = sbr.rel target = $region3
    $region8: #{snn_forward_arrays.5} parent=1 // loop_exit
      _

// kernel: snn_forward_arrays.6
$region0: #{snn_forward_arrays.6}
  #allocation0 [shape = 'u32[]', space=smem, size = 0x4, offset = 0x4, fixed_abs, tag = 'smem constant byte address 0x4 - core index']
  #allocation1 [shape = 'u32[144,128]{1,0:T(1,128)}', space=vmem, size = 0x12000, scoped, tag = 'internal scratch']
  %s0 = inlined_call_operand.vmem [shape: bf16[4,8,288], index: 0, kind: input, shape index: {}]
  %s1 = inlined_call_operand.vmem [shape: bf16[288,64], index: 1, kind: input, shape index: {}]
  %s2 = inlined_call_operand.vmem [shape: f32[1,64], index: 2, kind: input, shape index: {}]
  %s3 = inlined_call_operand.vmem [shape: f32[8,64], index: 3, kind: output, shape index: {}]
  %s4 = sld [smem:[#allocation0]]
  $region22: #{snn_forward_arrays.6} parent=0
    _
  %s6 = ssub.s32 1, %s4
  %s7 = scalar_select 0, %s6, %s4
  // Predicated region
  $region2: #{snn_forward_arrays.6} parent=0 // pred_check
    _
  $region3: #{snn_forward_arrays.6} parent=0 // pred_check_branch
    %9 = sbr.rel (0) target = $region5
  $region4: #{snn_forward_arrays.6} parent=0 // pred_region
    _
  $region5: #{snn_forward_arrays.6} parent=0 // pred_fallthru
    _
  // Predicated region
  $region6: #{snn_forward_arrays.6} parent=0 // pred_check
    _
  $region7: #{snn_forward_arrays.6} parent=0 // pred_check_branch
    %11 = sbr.rel (0) target = $region9
  $region8: #{snn_forward_arrays.6} parent=0 // pred_region
    _
  $region9: #{snn_forward_arrays.6} parent=0 // pred_fallthru
    _
  // Predicated region
  $region10: #{snn_forward_arrays.6} parent=0 // pred_check
    _
  $region11: #{snn_forward_arrays.6} parent=0 // pred_check_branch
    %13 = sbr.rel (0) target = $region13
  $region12: #{snn_forward_arrays.6} parent=0 // pred_region
    _
  $region13: #{snn_forward_arrays.6} parent=0 // pred_fallthru
    _
  %v15 = vld [vmem:[%s0] sm:$0xff]
  %v16 = vld [vmem:[%s0 + $0x8] sm:$0xf]
  %v17 = vld [vmem:[%s0 + $0xc] sm:$0xff]
  %v18 = vld [vmem:[%s0 + $0x14] sm:$0xf]
  %v19 = vld [vmem:[%s0 + $0x18] sm:$0xff]
  %v20 = vld [vmem:[%s0 + $0x20] sm:$0xf]
  %v21 = vld [vmem:[%s0 + $0x24] sm:$0xff]
  %v22 = vld [vmem:[%s0 + $0x2c] sm:$0xf]
  %v23 = vld [vmem:[%s1] sm:$0xf]
  %v24 = vld [vmem:[%s1 + $0x4] sm:$0xf]
  %v25 = vld [vmem:[%s1 + $0x8] sm:$0xf]
  %v26 = vld [vmem:[%s1 + $0xc] sm:$0xf]
  %v27 = vld [vmem:[%s1 + $0x10] sm:$0xf]
  %v28 = vld [vmem:[%s1 + $0x14] sm:$0xf]
  %v29 = vld [vmem:[%s1 + $0x18] sm:$0xf]
  %v30 = vld [vmem:[%s1 + $0x1c] sm:$0xf]
  %v31 = vld [vmem:[%s1 + $0x20] sm:$0xf]
  %v32 = vld [vmem:[%s1 + $0x24] sm:$0xf]
  %v33 = vld [vmem:[%s1 + $0x28] sm:$0xf]
  %v34 = vld [vmem:[%s1 + $0x2c] sm:$0xf]
  %v35 = vld [vmem:[%s1 + $0x30] sm:$0xf]
  %v36 = vld [vmem:[%s1 + $0x34] sm:$0xf]
  %v37 = vld [vmem:[%s1 + $0x38] sm:$0xf]
  %v38 = vld [vmem:[%s1 + $0x3c] sm:$0xf]
  %v39 = vld [vmem:[%s1 + $0x40] sm:$0xf]
  %v40 = vld [vmem:[%s1 + $0x44] sm:$0xf]
  %v41 = vld [vmem:[%s1 + $0x48] sm:$0xf]
  %v42 = vld [vmem:[%s1 + $0x4c] sm:$0xf]
  %v43 = vld [vmem:[%s1 + $0x50] sm:$0xf]
  %v44 = vld [vmem:[%s1 + $0x54] sm:$0xf]
  %v45 = vld [vmem:[%s1 + $0x58] sm:$0xf]
  %v46 = vld [vmem:[%s1 + $0x5c] sm:$0xf]
  %v47 = vld [vmem:[%s1 + $0x60] sm:$0xf]
  %v48 = vld [vmem:[%s1 + $0x64] sm:$0xf]
  %v49 = vld [vmem:[%s1 + $0x68] sm:$0xf]
  %v50 = vld [vmem:[%s1 + $0x6c] sm:$0xf]
  %v51 = vld [vmem:[%s1 + $0x70] sm:$0xf]
  %v52 = vld [vmem:[%s1 + $0x74] sm:$0xf]
  %v53 = vld [vmem:[%s1 + $0x78] sm:$0xf]
  %v54 = vld [vmem:[%s1 + $0x7c] sm:$0xf]
  %v55 = vld [vmem:[%s1 + $0x80] sm:$0xf]
  %v56 = vld [vmem:[%s1 + $0x84] sm:$0xf]
  %v57 = vld [vmem:[%s1 + $0x88] sm:$0xf]
  %v58 = vld [vmem:[%s1 + $0x8c] sm:$0xf]
  %v67 = vunpack.c.l.b16 %v15
  %v68 = vunpack.c.h.b16 %v15
  %v69 = vunpack.c.l.b16 %v16
  %v70 = vunpack.c.l.b16 %v17
  %v71 = vunpack.c.h.b16 %v17
  %v72 = vunpack.c.l.b16 %v18
  %v73 = vunpack.c.l.b16 %v19
  %v74 = vunpack.c.h.b16 %v19
  %v75 = vunpack.c.l.b16 %v20
  %v76 = vunpack.c.l.b16 %v21
  %v77 = vunpack.c.h.b16 %v21
  %v78 = vunpack.c.l.b16 %v22
  %v79 = vpack.c.b16 %v70, %v67
  %v80 = vpack.c.b16 %v71, %v68
  %v81 = vpack.c.b16 %v72, %v69
  %v82 = vpack.c.b16 %v76, %v73
  %v83 = vpack.c.b16 %v77, %v74
  %v84 = vpack.c.b16 %v78, %v75
  %v125 = vunpack.c.l.b16 %v23
  %v126 = vunpack.c.l.b16 %v24
  %v127 = vunpack.c.l.b16 %v25
  %v128 = vunpack.c.l.b16 %v26
  %v129 = vunpack.c.l.b16 %v27
  %v130 = vunpack.c.l.b16 %v28
  %v131 = vunpack.c.l.b16 %v29
  %v132 = vunpack.c.l.b16 %v30
  %v133 = vunpack.c.l.b16 %v31
  %v134 = vunpack.c.l.b16 %v32
  %v135 = vunpack.c.l.b16 %v33
  %v136 = vunpack.c.l.b16 %v34
  %v137 = vunpack.c.l.b16 %v35
  %v138 = vunpack.c.l.b16 %v36
  %v139 = vunpack.c.l.b16 %v37
  %v140 = vunpack.c.l.b16 %v38
  %v141 = vunpack.c.l.b16 %v39
  %v142 = vunpack.c.l.b16 %v40
  %v143 = vunpack.c.l.b16 %v41
  %v144 = vunpack.c.l.b16 %v42
  %v145 = vunpack.c.l.b16 %v43
  %v146 = vunpack.c.l.b16 %v44
  %v147 = vunpack.c.l.b16 %v45
  %v148 = vunpack.c.l.b16 %v46
  %v149 = vunpack.c.l.b16 %v47
  %v150 = vunpack.c.l.b16 %v48
  %v151 = vunpack.c.l.b16 %v49
  %v152 = vunpack.c.l.b16 %v50
  %v153 = vunpack.c.l.b16 %v51
  %v154 = vunpack.c.l.b16 %v52
  %v155 = vunpack.c.l.b16 %v53
  %v156 = vunpack.c.l.b16 %v54
  %v157 = vunpack.c.l.b16 %v55
  %v158 = vunpack.c.l.b16 %v56
  %v159 = vunpack.c.l.b16 %v57
  %v160 = vunpack.c.l.b16 %v58
  %v161 = vpack.c.b16 %v126, %v125
  %v162 = vpack.c.b16 %v128, %v127
  %v163 = vpack.c.b16 %v130, %v129
  %v164 = vpack.c.b16 %v132, %v131
  %v165 = vpack.c.b16 %v134, %v133
  %v166 = vpack.c.b16 %v136, %v135
  %v167 = vpack.c.b16 %v138, %v137
  %v168 = vpack.c.b16 %v140, %v139
  %v169 = vpack.c.b16 %v142, %v141
  %v170 = vpack.c.b16 %v144, %v143
  %v171 = vpack.c.b16 %v146, %v145
  %v172 = vpack.c.b16 %v148, %v147
  %v173 = vpack.c.b16 %v150, %v149
  %v174 = vpack.c.b16 %v152, %v151
  %v175 = vpack.c.b16 %v154, %v153
  %v176 = vpack.c.b16 %v156, %v155
  %v177 = vpack.c.b16 %v158, %v157
  %v178 = vpack.c.b16 %v160, %v159
  %vm197 = vcmask 261120
  %v199 = vsel %vm197, %v81, 0
  %v202 = vsel %vm197, %v84, 0
  %204 = vmatprep.subr.bf16.mxu0 0
  %205 = vmatpush1.bf16.msra.mxu0 %v161
  %206 = vmatprep.subr.bf16.mxu0 0
  %207 = vmatpush1.bf16.msra.mxu0 %v162
  %208 = vmatprep.subr.bf16.mxu0 0
  %209 = vmatpush1.bf16.msra.mxu0 %v163
  %210 = vmatprep.subr.bf16.mxu0 0
  %211 = vmatpush1.bf16.msra.mxu0 %v164
  %212 = vmatprep.subr.bf16.mxu0 0
  %213 = vmatpush1.bf16.msra.mxu0 %v165
  %214 = vmatprep.subr.bf16.mxu0 0
  %215 = vmatpush1.bf16.msra.mxu0 %v166
  %216 = vmatprep.subr.bf16.mxu0 0
  %217 = vmatpush1.bf16.msra.mxu0 %v167
  %218 = vmatprep.subr.bf16.mxu0 0
  %219 = vmatpush1.bf16.msra.mxu0 %v168
  %220 = vmatprep.subr.bf16.mxu0 0
  %221 = vmatpush1.bf16.msra.mxu0 %v169
  %222 = vmatprep.subr.bf16.mxu0 0
  %223 = vmatpush1.bf16.msra.mxu0 %v170
  %224 = vmatprep.subr.bf16.mxu0 0
  %225 = vmatpush1.bf16.msra.mxu0 %v171
  %226 = vmatprep.subr.bf16.mxu0 0
  %227 = vmatpush1.bf16.msra.mxu0 %v172
  %228 = vmatprep.subr.bf16.mxu0 0
  %229 = vmatpush1.bf16.msra.mxu0 %v173
  %230 = vmatprep.subr.bf16.mxu0 0
  %231 = vmatpush1.bf16.msra.mxu0 %v174
  %232 = vmatprep.subr.bf16.mxu0 0
  %233 = vmatpush1.bf16.msra.mxu0 %v175
  %234 = vmatprep.subr.bf16.mxu0 0
  %235 = vmatpush1.bf16.msra.mxu0 %v176
  %236 = vmatprep.mubr.bf16.mxu0 %v80
  %237 = vmatmul.mubr.bf16.gmra.mrb[0].mxu0 %v79
  %v238 = vpop.f32.mrb[0].mxu0
  %v239 = vadd.f32 0.0, %v238
  %v240 = vpop.f32.mrb[0].mxu0
  %v241 = vpop.f32.mrb[0].mxu0
  %v242 = vadd.f32 0.0, %v241
  %v243 = vpop.f32.mrb[0].mxu0
  %244 = vmatprep.mubr.bf16.mxu0 %v83
  %245 = vmatmul.mubr.bf16.gmra.mrb[0].mxu0 %v82
  %v246 = vpop.f32.mrb[0].mxu0
  %v247 = vadd.f32 0.0, %v246
  %v248 = vpop.f32.mrb[0].mxu0
  %v249 = vpop.f32.mrb[0].mxu0
  %v250 = vadd.f32 0.0, %v249
  %v251 = vpop.f32.mrb[0].mxu0
  %252 = vdwg.mxu0
  %253 = vmatprep.subr.bf16.mxu0 0
  %254 = vmatpush1.bf16.msra.mxu0 %v177
  %255 = vmatprep.subr.bf16.mxu0 0
  %256 = vmatpush1.bf16.msra.mxu0 %v178
  %257 = vmatprep.subr.bf16.mxu0 0
  %258 = vmatpush1.bf16.msra.mxu0 0
  %259 = vmatprep.subr.bf16.mxu0 0
  %260 = vmatpush1.bf16.msra.mxu0 0
  %261 = vmatprep.subr.bf16.mxu0 0
  %262 = vmatpush1.bf16.msra.mxu0 0
  %263 = vmatprep.subr.bf16.mxu0 0
  %264 = vmatpush1.bf16.msra.mxu0 0
  %265 = vmatprep.subr.bf16.mxu0 0
  %266 = vmatpush1.bf16.msra.mxu0 0
  %267 = vmatprep.subr.bf16.mxu0 0
  %268 = vmatpush1.bf16.msra.mxu0 0
  %269 = vmatprep.subr.bf16.mxu0 0
  %270 = vmatpush1.bf16.msra.mxu0 0
  %271 = vmatprep.subr.bf16.mxu0 0
  %272 = vmatpush1.bf16.msra.mxu0 0
  %273 = vmatprep.subr.bf16.mxu0 0
  %274 = vmatpush1.bf16.msra.mxu0 0
  %275 = vmatprep.subr.bf16.mxu0 0
  %276 = vmatpush1.bf16.msra.mxu0 0
  %277 = vmatprep.subr.bf16.mxu0 0
  %278 = vmatpush1.bf16.msra.mxu0 0
  %279 = vmatprep.subr.bf16.mxu0 0
  %280 = vmatpush1.bf16.msra.mxu0 0
  %281 = vmatprep.subr.bf16.mxu0 0
  %282 = vmatpush1.bf16.msra.mxu0 0
  %283 = vmatprep.subr.bf16.mxu0 0
  %284 = vmatpush1.bf16.msra.mxu0 0
  %285 = vmatprep.mubr.bf16.mxu0 0
  %286 = vmatmul.mubr.bf16.gmra.mrb[0].mxu0 %v199
  %v287 = vpop.f32.mrb[0].mxu0
  %v288 = vadd.f32 %v239, %v287
  %v289 = vpop.f32.mrb[0].mxu0
  %v290 = vpop.f32.mrb[0].mxu0
  %v291 = vadd.f32 %v242, %v290
  %v292 = vpop.f32.mrb[0].mxu0
  %293 = vmatprep.mubr.bf16.mxu0 0
  %294 = vmatmul.mubr.bf16.gmra.mrb[0].mxu0 %v202
  %v295 = vpop.f32.mrb[0].mxu0
  %v296 = vadd.f32 %v247, %v295
  %v297 = vpop.f32.mrb[0].mxu0
  %v298 = vpop.f32.mrb[0].mxu0
  %v299 = vadd.f32 %v250, %v298
  %v300 = vpop.f32.mrb[0].mxu0
  %301 = vdwg.mxu0
  %v302 = vmax.f32 %v288, %v291
  %v303 = vmax.f32 %v302, %v296
  %v304 = vmax.f32 %v303, %v299
  %v305 = vld [vmem:[%s2] sm:$0x1]
  %v307 = vlaneseq
  %v308 = vshrl.u32 %v307, 7
  %v309 = vsub.s32 0, %v308
  %v310 = vrot.slane %v305, %v309
  %v312 = vadd.f32 %v304, %v310
  %v313 = vmax.f32 %v312, 0.0
  %vm314 = vcmask 523264
  %315 = vst.msk [vmem:[%s3] sm:$0xff] %vm314, %v313
  // Predicated region
  $region14: #{snn_forward_arrays.6} parent=0 // pred_check
    _
  $region15: #{snn_forward_arrays.6} parent=0 // pred_check_branch
    %317 = sbr.rel (0) target = $region17
  $region16: #{snn_forward_arrays.6} parent=0 // pred_region
    _
  $region17: #{snn_forward_arrays.6} parent=0 // pred_fallthru
    _
  // Predicated region
  $region18: #{snn_forward_arrays.6} parent=0 // pred_check
    _
  $region19: #{snn_forward_arrays.6} parent=0 // pred_check_branch
    %319 = sbr.rel (0) target = $region21
  $region20: #{snn_forward_arrays.6} parent=0 // pred_region
    _
  $region21: #{snn_forward_arrays.6} parent=0 // pred_fallthru
    _

// kernel: snn_forward_arrays.7
$region0: #{snn_forward_arrays.7}
  #allocation0 [shape = 'u32[]', space=smem, size = 0x4, offset = 0x4, fixed_abs, tag = 'smem constant byte address 0x4 - core index']
  #allocation1 [shape = 'u32[144,128]{1,0:T(1,128)}', space=vmem, size = 0x12000, scoped, tag = 'internal scratch']
  %s0 = inlined_call_operand.vmem [shape: f32[2,256], index: 0, kind: input, shape index: {}]
  %s1 = inlined_call_operand.vmem [shape: f32[256,384], index: 1, kind: input, shape index: {}]
  %s2 = inlined_call_operand.vmem [shape: f32[1,384], index: 2, kind: input, shape index: {}]
  %s3 = inlined_call_operand.vmem [shape: f32[5,2,384], index: 3, kind: output, shape index: {0}]
  %s4 = inlined_call_operand.hbm [shape: f32[2,128], index: 4, kind: output, shape index: {1}]
  %5 = xla_tuple %s3, %s4
  %s6 = sld [smem:[#allocation0]]
  $region30: #{snn_forward_arrays.7} parent=0
    _
  %s8 = ssub.s32 1, %s6
  %s9 = scalar_select 0, %s8, %s6
  $region1: #{snn_forward_arrays.7} parent=0
    #allocation2 [shape = 'u8[1024]{0}', space=vmem, size = 0x400, scoped, tag = 'output window, operand 1, single buffered']
    #allocation3 [shape = 's32[1]{0}', space=sflag, size = 0x4, scoped, tag = 'scoped memory for snn_forward_arrays.7']
    %10 = vsyncpa [#allocation3], 0
    // Predicated region
    $region2: #{snn_forward_arrays.7} parent=1 // pred_check
      _
    $region3: #{snn_forward_arrays.7} parent=1 // pred_check_branch
      %12 = sbr.rel (0) target = $region5
    $region4: #{snn_forward_arrays.7} parent=1 // pred_region
      _
    $region5: #{snn_forward_arrays.7} parent=1 // pred_fallthru
      _
    // Predicated region
    $region6: #{snn_forward_arrays.7} parent=1 // pred_check
      _
    $region7: #{snn_forward_arrays.7} parent=1 // pred_check_branch
      %14 = sbr.rel (0) target = $region9
    $region8: #{snn_forward_arrays.7} parent=1 // pred_region
      _
    $region9: #{snn_forward_arrays.7} parent=1 // pred_fallthru
      _
    // Predicated region
    $region10: #{snn_forward_arrays.7} parent=1 // pred_check
      _
    $region11: #{snn_forward_arrays.7} parent=1 // pred_check_branch
      %16 = sbr.rel (0) target = $region13
    $region12: #{snn_forward_arrays.7} parent=1 // pred_region
      _
    $region13: #{snn_forward_arrays.7} parent=1 // pred_fallthru
      _
    %v17 = vld [vmem:[%s0] sm:$0xf]
    %v18 = vld [vmem:[%s1] sm:$0xff]
    %v19 = vld [vmem:[%s1 + $0x8] sm:$0xff]
    %v20 = vld [vmem:[%s1 + $0x10] sm:$0xff]
    %v21 = vld [vmem:[%s1 + $0x18] sm:$0xff]
    %v22 = vld [vmem:[%s1 + $0x20] sm:$0xff]
    %v23 = vld [vmem:[%s1 + $0x28] sm:$0xff]
    %v24 = vld [vmem:[%s1 + $0x30] sm:$0xff]
    %v25 = vld [vmem:[%s1 + $0x38] sm:$0xff]
    %v26 = vld [vmem:[%s1 + $0x40] sm:$0xff]
    %v27 = vld [vmem:[%s1 + $0x48] sm:$0xff]
    %v28 = vld [vmem:[%s1 + $0x50] sm:$0xff]
    %v29 = vld [vmem:[%s1 + $0x58] sm:$0xff]
    %v30 = vld [vmem:[%s1 + $0x60] sm:$0xff]
    %v31 = vld [vmem:[%s1 + $0x68] sm:$0xff]
    %v32 = vld [vmem:[%s1 + $0x70] sm:$0xff]
    %v33 = vld [vmem:[%s1 + $0x78] sm:$0xff]
    %v34 = vld [vmem:[%s1 + $0x80] sm:$0xff]
    %v35 = vld [vmem:[%s1 + $0x88] sm:$0xff]
    %v36 = vld [vmem:[%s1 + $0x90] sm:$0xff]
    %v37 = vld [vmem:[%s1 + $0x98] sm:$0xff]
    %v38 = vld [vmem:[%s1 + $0xa0] sm:$0xff]
    %v39 = vld [vmem:[%s1 + $0xa8] sm:$0xff]
    %v40 = vld [vmem:[%s1 + $0xb0] sm:$0xff]
    %v41 = vld [vmem:[%s1 + $0xb8] sm:$0xff]
    %v42 = vld [vmem:[%s1 + $0xc0] sm:$0xff]
    %v43 = vld [vmem:[%s1 + $0xc8] sm:$0xff]
    %v44 = vld [vmem:[%s1 + $0xd0] sm:$0xff]
    %v45 = vld [vmem:[%s1 + $0xd8] sm:$0xff]
    %v46 = vld [vmem:[%s1 + $0xe0] sm:$0xff]
    %v47 = vld [vmem:[%s1 + $0xe8] sm:$0xff]
    %v48 = vld [vmem:[%s1 + $0xf0] sm:$0xff]
    %v49 = vld [vmem:[%s1 + $0xf8] sm:$0xff]
    %v50 = vld [vmem:[%s1 + $0x100] sm:$0xff]
    %v51 = vld [vmem:[%s1 + $0x108] sm:$0xff]
    %v52 = vld [vmem:[%s1 + $0x110] sm:$0xff]
    %v53 = vld [vmem:[%s1 + $0x118] sm:$0xff]
    %v54 = vld [vmem:[%s1 + $0x120] sm:$0xff]
    %v55 = vld [vmem:[%s1 + $0x128] sm:$0xff]
    %v56 = vld [vmem:[%s1 + $0x130] sm:$0xff]
    %v57 = vld [vmem:[%s1 + $0x138] sm:$0xff]
    %v58 = vld [vmem:[%s1 + $0x140] sm:$0xff]
    %v59 = vld [vmem:[%s1 + $0x148] sm:$0xff]
    %v60 = vld [vmem:[%s1 + $0x150] sm:$0xff]
    %v61 = vld [vmem:[%s1 + $0x158] sm:$0xff]
    %v62 = vld [vmem:[%s1 + $0x160] sm:$0xff]
    %v63 = vld [vmem:[%s1 + $0x168] sm:$0xff]
    %v64 = vld [vmem:[%s1 + $0x170] sm:$0xff]
    %v65 = vld [vmem:[%s1 + $0x178] sm:$0xff]
    %v66 = vld [vmem:[%s1 + $0x180] sm:$0xff]
    %v67 = vld [vmem:[%s1 + $0x188] sm:$0xff]
    %v68 = vld [vmem:[%s1 + $0x190] sm:$0xff]
    %v69 = vld [vmem:[%s1 + $0x198] sm:$0xff]
    %v70 = vld [vmem:[%s1 + $0x1a0] sm:$0xff]
    %v71 = vld [vmem:[%s1 + $0x1a8] sm:$0xff]
    %v72 = vld [vmem:[%s1 + $0x1b0] sm:$0xff]
    %v73 = vld [vmem:[%s1 + $0x1b8] sm:$0xff]
    %v74 = vld [vmem:[%s1 + $0x1c0] sm:$0xff]
    %v75 = vld [vmem:[%s1 + $0x1c8] sm:$0xff]
    %v76 = vld [vmem:[%s1 + $0x1d0] sm:$0xff]
    %v77 = vld [vmem:[%s1 + $0x1d8] sm:$0xff]
    %v78 = vld [vmem:[%s1 + $0x1e0] sm:$0xff]
    %v79 = vld [vmem:[%s1 + $0x1e8] sm:$0xff]
    %v80 = vld [vmem:[%s1 + $0x1f0] sm:$0xff]
    %v81 = vld [vmem:[%s1 + $0x1f8] sm:$0xff]
    %v82 = vld [vmem:[%s1 + $0x200] sm:$0xff]
    %v83 = vld [vmem:[%s1 + $0x208] sm:$0xff]
    %v84 = vld [vmem:[%s1 + $0x210] sm:$0xff]
    %v85 = vld [vmem:[%s1 + $0x218] sm:$0xff]
    %v86 = vld [vmem:[%s1 + $0x220] sm:$0xff]
    %v87 = vld [vmem:[%s1 + $0x228] sm:$0xff]
    %v88 = vld [vmem:[%s1 + $0x230] sm:$0xff]
    %v89 = vld [vmem:[%s1 + $0x238] sm:$0xff]
    %v90 = vld [vmem:[%s1 + $0x240] sm:$0xff]
    %v91 = vld [vmem:[%s1 + $0x248] sm:$0xff]
    %v92 = vld [vmem:[%s1 + $0x250] sm:$0xff]
    %v93 = vld [vmem:[%s1 + $0x258] sm:$0xff]
    %v94 = vld [vmem:[%s1 + $0x260] sm:$0xff]
    %v95 = vld [vmem:[%s1 + $0x268] sm:$0xff]
    %v96 = vld [vmem:[%s1 + $0x270] sm:$0xff]
    %v97 = vld [vmem:[%s1 + $0x278] sm:$0xff]
    %v98 = vld [vmem:[%s1 + $0x280] sm:$0xff]
    %v99 = vld [vmem:[%s1 + $0x288] sm:$0xff]
    %v100 = vld [vmem:[%s1 + $0x290] sm:$0xff]
    %v101 = vld [vmem:[%s1 + $0x298] sm:$0xff]
    %v102 = vld [vmem:[%s1 + $0x2a0] sm:$0xff]
    %v103 = vld [vmem:[%s1 + $0x2a8] sm:$0xff]
    %v104 = vld [vmem:[%s1 + $0x2b0] sm:$0xff]
    %v105 = vld [vmem:[%s1 + $0x2b8] sm:$0xff]
    %v106 = vld [vmem:[%s1 + $0x2c0] sm:$0xff]
    %v107 = vld [vmem:[%s1 + $0x2c8] sm:$0xff]
    %v108 = vld [vmem:[%s1 + $0x2d0] sm:$0xff]
    %v109 = vld [vmem:[%s1 + $0x2d8] sm:$0xff]
    %v110 = vld [vmem:[%s1 + $0x2e0] sm:$0xff]
    %v111 = vld [vmem:[%s1 + $0x2e8] sm:$0xff]
    %v112 = vld [vmem:[%s1 + $0x2f0] sm:$0xff]
    %v113 = vld [vmem:[%s1 + $0x2f8] sm:$0xff]
    %v114 = vld [vmem:[%s2] sm:$0x7]
    %v116 = vlaneseq
    %v117 = vshrl.u32 %v116, 7
    %v118 = vsub.s32 0, %v117
    %v119 = vrot.slane %v114, %v118
    %v120 = vlaneseq
    %v121 = vshrl.u32 %v120, 7
    %v122 = vsub.s32 1, %v121
    %v123 = vrot.slane %v114, %v122
    %v124 = vlaneseq
    %v125 = vshrl.u32 %v124, 7
    %v126 = vsub.s32 2, %v125
    %v127 = vrot.slane %v114, %v126
    %v133 = vunpack.c.l.s4 1983009808
    %v134 = vunpack.c.0.s8 %v133
    %v135 = vlaneseq
    %v136 = vshrl.u32 %v135, 7
    %v137 = vsub.s32 %v134, %v136
    %v138 = vrot.slane %v17, %v137
    %v139 = vcombine.high %v138, %v138
    %142 = vmatprep.subr.mxu0 %v19
    %143 = vmatpush1.msra.mxu0 %v18
    %144 = vmatprep.subr.mxu0 %v22
    %145 = vmatpush1.msra.mxu0 %v21
    %146 = vmatprep.subr.mxu0 %v25
    %147 = vmatpush1.msra.mxu0 %v24
    %148 = vmatprep.subr.mxu0 %v28
    %149 = vmatpush1.msra.mxu0 %v27
    %150 = vmatprep.subr.mxu0 %v31
    %151 = vmatpush1.msra.mxu0 %v30
    %152 = vmatprep.subr.mxu0 %v34
    %153 = vmatpush1.msra.mxu0 %v33
    %154 = vmatprep.subr.mxu0 %v37
    %155 = vmatpush1.msra.mxu0 %v36
    %156 = vmatprep.subr.mxu0 %v40
    %157 = vmatpush1.msra.mxu0 %v39
    %158 = vmatprep.subr.mxu0 %v43
    %159 = vmatpush1.msra.mxu0 %v42
    %160 = vmatprep.subr.mxu0 %v46
    %161 = vmatpush1.msra.mxu0 %v45
    %162 = vmatprep.subr.mxu0 %v49
    %163 = vmatpush1.msra.mxu0 %v48
    %164 = vmatprep.subr.mxu0 %v52
    %165 = vmatpush1.msra.mxu0 %v51
    %166 = vmatprep.subr.mxu0 %v55
    %167 = vmatpush1.msra.mxu0 %v54
    %168 = vmatprep.subr.mxu0 %v58
    %169 = vmatpush1.msra.mxu0 %v57
    %170 = vmatprep.subr.mxu0 %v61
    %171 = vmatpush1.msra.mxu0 %v60
    %172 = vmatprep.subr.mxu0 %v64
    %173 = vmatpush1.msra.mxu0 %v63
    %174 = vmatprep.subr.mxu0 %v67
    %175 = vmatpush1.msra.mxu0 %v66
    %176 = vmatprep.subr.mxu0 %v70
    %177 = vmatpush1.msra.mxu0 %v69
    %178 = vmatprep.subr.mxu0 %v73
    %179 = vmatpush1.msra.mxu0 %v72
    %180 = vmatprep.subr.mxu0 %v76
    %181 = vmatpush1.msra.mxu0 %v75
    %182 = vmatprep.subr.mxu0 %v79
    %183 = vmatpush1.msra.mxu0 %v78
    %184 = vmatprep.subr.mxu0 %v82
    %185 = vmatpush1.msra.mxu0 %v81
    %186 = vmatprep.subr.mxu0 %v85
    %187 = vmatpush1.msra.mxu0 %v84
    %188 = vmatprep.subr.mxu0 %v88
    %189 = vmatpush1.msra.mxu0 %v87
    %190 = vmatprep.subr.mxu0 %v91
    %191 = vmatpush1.msra.mxu0 %v90
    %192 = vmatprep.subr.mxu0 %v94
    %193 = vmatpush1.msra.mxu0 %v93
    %194 = vmatprep.subr.mxu0 %v97
    %195 = vmatpush1.msra.mxu0 %v96
    %196 = vmatprep.subr.mxu0 %v100
    %197 = vmatpush1.msra.mxu0 %v99
    %198 = vmatprep.subr.mxu0 %v103
    %199 = vmatpush1.msra.mxu0 %v102
    %200 = vmatprep.subr.mxu0 %v106
    %201 = vmatpush1.msra.mxu0 %v105
    %202 = vmatprep.subr.mxu0 %v109
    %203 = vmatpush1.msra.mxu0 %v108
    %204 = vmatprep.subr.mxu0 %v112
    %205 = vmatpush1.msra.mxu0 %v111
    %206 = vmatprep.mubr.f32.mxu0 %v139
    %207 = vmatmul.mubr.f32.gmra.mrb[0].mxu0 %v138
    %v208 = vpop.f32.mrb[0].mxu0
    %v209 = vadd.f32 %v119, %v208
    %v210 = vpop.f32.mrb[0].mxu0
    %v211 = vadd.f32 %v123, %v210
    %212 = vdwg.mxu0
    %213 = vmatprep.subr.mxu0 0.0
    %214 = vmatpush1.msra.mxu0 %v20
    %215 = vmatprep.subr.mxu0 0.0
    %216 = vmatpush1.msra.mxu0 %v23
    %217 = vmatprep.subr.mxu0 0.0
    %218 = vmatpush1.msra.mxu0 %v26
    %219 = vmatprep.subr.mxu0 0.0
    %220 = vmatpush1.msra.mxu0 %v29
    %221 = vmatprep.subr.mxu0 0.0
    %222 = vmatpush1.msra.mxu0 %v32
    %223 = vmatprep.subr.mxu0 0.0
    %224 = vmatpush1.msra.mxu0 %v35
    %225 = vmatprep.subr.mxu0 0.0
    %226 = vmatpush1.msra.mxu0 %v38
    %227 = vmatprep.subr.mxu0 0.0
    %228 = vmatpush1.msra.mxu0 %v41
    %229 = vmatprep.subr.mxu0 0.0
    %230 = vmatpush1.msra.mxu0 %v44
    %231 = vmatprep.subr.mxu0 0.0
    %232 = vmatpush1.msra.mxu0 %v47
    %233 = vmatprep.subr.mxu0 0.0
    %234 = vmatpush1.msra.mxu0 %v50
    %235 = vmatprep.subr.mxu0 0.0
    %236 = vmatpush1.msra.mxu0 %v53
    %237 = vmatprep.subr.mxu0 0.0
    %238 = vmatpush1.msra.mxu0 %v56
    %239 = vmatprep.subr.mxu0 0.0
    %240 = vmatpush1.msra.mxu0 %v59
    %241 = vmatprep.subr.mxu0 0.0
    %242 = vmatpush1.msra.mxu0 %v62
    %243 = vmatprep.subr.mxu0 0.0
    %244 = vmatpush1.msra.mxu0 %v65
    %245 = vmatprep.subr.mxu0 0.0
    %246 = vmatpush1.msra.mxu0 %v68
    %247 = vmatprep.subr.mxu0 0.0
    %248 = vmatpush1.msra.mxu0 %v71
    %249 = vmatprep.subr.mxu0 0.0
    %250 = vmatpush1.msra.mxu0 %v74
    %251 = vmatprep.subr.mxu0 0.0
    %252 = vmatpush1.msra.mxu0 %v77
    %253 = vmatprep.subr.mxu0 0.0
    %254 = vmatpush1.msra.mxu0 %v80
    %255 = vmatprep.subr.mxu0 0.0
    %256 = vmatpush1.msra.mxu0 %v83
    %257 = vmatprep.subr.mxu0 0.0
    %258 = vmatpush1.msra.mxu0 %v86
    %259 = vmatprep.subr.mxu0 0.0
    %260 = vmatpush1.msra.mxu0 %v89
    %261 = vmatprep.subr.mxu0 0.0
    %262 = vmatpush1.msra.mxu0 %v92
    %263 = vmatprep.subr.mxu0 0.0
    %264 = vmatpush1.msra.mxu0 %v95
    %265 = vmatprep.subr.mxu0 0.0
    %266 = vmatpush1.msra.mxu0 %v98
    %267 = vmatprep.subr.mxu0 0.0
    %268 = vmatpush1.msra.mxu0 %v101
    %269 = vmatprep.subr.mxu0 0.0
    %270 = vmatpush1.msra.mxu0 %v104
    %271 = vmatprep.subr.mxu0 0.0
    %272 = vmatpush1.msra.mxu0 %v107
    %273 = vmatprep.subr.mxu0 0.0
    %274 = vmatpush1.msra.mxu0 %v110
    %275 = vmatprep.subr.mxu0 0.0
    %276 = vmatpush1.msra.mxu0 %v113
    %277 = vmatprep.mubr.f32.mxu0 %v139
    %278 = vmatmul.mubr.f32.gmra.mrb[0].mxu0 %v138
    %v279 = vpop.f32.mrb[0].mxu0
    %v280 = vadd.f32 %v127, %v279
    %v281 = vpop.f32.mrb[0].mxu0
    %282 = vdwg.mxu0
    %v283 = vadd.f32 %v209, 0.0
    %v284 = vadd.f32 %v211, 0.0
    %v285 = vadd.f32 %v280, 0.0
    %vm286 = vcmp.ge.f32.partialorder %v283, 1.0
    %vm287 = vcmp.ge.f32.partialorder %v284, 1.0
    %vm288 = vcmp.ge.f32.partialorder %v285, 1.0
    %v289 = vsel %vm286, 1, 0
    %v290 = vsel %vm287, 1, 0
    %v291 = vsel %vm288, 1, 0
    %v292 = vcvt.s32.f32 %v289
    %v293 = vcvt.s32.f32 %v290
    %v294 = vcvt.s32.f32 %v291
    %v295 = vsub.f32 1.0, %v292
    %v296 = vsub.f32 1.0, %v293
    %v297 = vsub.f32 1.0, %v294
    %v298 = vmul.f32 %v283, %v295
    %v299 = vmul.f32 %v284, %v296
    %v300 = vmul.f32 %v285, %v297
    %v304 = vcombine.low %v292, %v293
    %v306 = vunpack.c.l.s4 1983009808
    %v307 = vunpack.c.0.s8 %v306
    %v308 = vlaneseq
    %v309 = vshrl.u32 %v308, 7
    %v310 = vsub.s32 %v307, %v309
    %v311 = vrot.slane %v304, %v310
    %v313 = vunpack.c.l.s4 1983009808
    %v314 = vunpack.c.0.s8 %v313
    %v315 = vlaneseq
    %v316 = vshrl.u32 %v315, 7
    %v317 = vsub.s32 %v314, %v316
    %v318 = vrot.slane %v294, %v317
    %v319 = vcombine.low %v311, %v318
    %321 = vst [vmem:[%s3] sm:$0x3f] %v319
    %v322 = vadd.f32 %v294, 0.0
    %v323 = vmul.f32 %v298, 0.5
    %v324 = vmul.f32 %v299, 0.5
    %v325 = vmul.f32 %v300, 0.5
    %v326 = vadd.f32 %v323, %v209
    %v327 = vadd.f32 %v324, %v211
    %v328 = vadd.f32 %v325, %v280
    %vm329 = vcmp.ge.f32.partialorder %v326, 1.0
    %vm330 = vcmp.ge.f32.partialorder %v327, 1.0
    %vm331 = vcmp.ge.f32.partialorder %v328, 1.0
    %v332 = vsel %vm329, 1, 0
    %v333 = vsel %vm330, 1, 0
    %v334 = vsel %vm331, 1, 0
    %v335 = vcvt.s32.f32 %v332
    %v336 = vcvt.s32.f32 %v333
    %v337 = vcvt.s32.f32 %v334
    %v338 = vsub.f32 1.0, %v335
    %v339 = vsub.f32 1.0, %v336
    %v340 = vsub.f32 1.0, %v337
    %v341 = vmul.f32 %v326, %v338
    %v342 = vmul.f32 %v327, %v339
    %v343 = vmul.f32 %v328, %v340
    %v347 = vcombine.low %v335, %v336
    %v349 = vunpack.c.l.s4 1983009808
    %v350 = vunpack.c.0.s8 %v349
    %v351 = vlaneseq
    %v352 = vshrl.u32 %v351, 7
    %v353 = vsub.s32 %v350, %v352
    %v354 = vrot.slane %v347, %v353
    %v356 = vunpack.c.l.s4 1983009808
    %v357 = vunpack.c.0.s8 %v356
    %v358 = vlaneseq
    %v359 = vshrl.u32 %v358, 7
    %v360 = vsub.s32 %v357, %v359
    %v361 = vrot.slane %v337, %v360
    %v362 = vcombine.low %v354, %v361
    %s364 = scalar_lea.vmem %s3, 6
    %365 = vst [vmem:[%s364] sm:$0x3f] %v362
    %v366 = vadd.f32 %v322, %v337
    %v367 = vmul.f32 %v341, 0.5
    %v368 = vmul.f32 %v342, 0.5
    %v369 = vmul.f32 %v343, 0.5
    %v370 = vadd.f32 %v367, %v209
    %v371 = vadd.f32 %v368, %v211
    %v372 = vadd.f32 %v369, %v280
    %vm373 = vcmp.ge.f32.partialorder %v370, 1.0
    %vm374 = vcmp.ge.f32.partialorder %v371, 1.0
    %vm375 = vcmp.ge.f32.partialorder %v372, 1.0
    %v376 = vsel %vm373, 1, 0
    %v377 = vsel %vm374, 1, 0
    %v378 = vsel %vm375, 1, 0
    %v379 = vcvt.s32.f32 %v376
    %v380 = vcvt.s32.f32 %v377
    %v381 = vcvt.s32.f32 %v378
    %v382 = vsub.f32 1.0, %v379
    %v383 = vsub.f32 1.0, %v380
    %v384 = vsub.f32 1.0, %v381
    %v385 = vmul.f32 %v370, %v382
    %v386 = vmul.f32 %v371, %v383
    %v387 = vmul.f32 %v372, %v384
    %v391 = vcombine.low %v379, %v380
    %v393 = vunpack.c.l.s4 1983009808
    %v394 = vunpack.c.0.s8 %v393
    %v395 = vlaneseq
    %v396 = vshrl.u32 %v395, 7
    %v397 = vsub.s32 %v394, %v396
    %v398 = vrot.slane %v391, %v397
    %v400 = vunpack.c.l.s4 1983009808
    %v401 = vunpack.c.0.s8 %v400
    %v402 = vlaneseq
    %v403 = vshrl.u32 %v402, 7
    %v404 = vsub.s32 %v401, %v403
    %v405 = vrot.slane %v381, %v404
    %v406 = vcombine.low %v398, %v405
    %s408 = scalar_lea.vmem %s3, 12
    %409 = vst [vmem:[%s408] sm:$0x3f] %v406
    %v410 = vadd.f32 %v366, %v381
    %v411 = vmul.f32 %v385, 0.5
    %v412 = vmul.f32 %v386, 0.5
    %v413 = vmul.f32 %v387, 0.5
    %v414 = vadd.f32 %v411, %v209
    %v415 = vadd.f32 %v412, %v211
    %v416 = vadd.f32 %v413, %v280
    %vm417 = vcmp.ge.f32.partialorder %v414, 1.0
    %vm418 = vcmp.ge.f32.partialorder %v415, 1.0
    %vm419 = vcmp.ge.f32.partialorder %v416, 1.0
    %v420 = vsel %vm417, 1, 0
    %v421 = vsel %vm418, 1, 0
    %v422 = vsel %vm419, 1, 0
    %v423 = vcvt.s32.f32 %v420
    %v424 = vcvt.s32.f32 %v421
    %v425 = vcvt.s32.f32 %v422
    %v426 = vsub.f32 1.0, %v423
    %v427 = vsub.f32 1.0, %v424
    %v428 = vsub.f32 1.0, %v425
    %v429 = vmul.f32 %v414, %v426
    %v430 = vmul.f32 %v415, %v427
    %v431 = vmul.f32 %v416, %v428
    %v435 = vcombine.low %v423, %v424
    %v437 = vunpack.c.l.s4 1983009808
    %v438 = vunpack.c.0.s8 %v437
    %v439 = vlaneseq
    %v440 = vshrl.u32 %v439, 7
    %v441 = vsub.s32 %v438, %v440
    %v442 = vrot.slane %v435, %v441
    %v444 = vunpack.c.l.s4 1983009808
    %v445 = vunpack.c.0.s8 %v444
    %v446 = vlaneseq
    %v447 = vshrl.u32 %v446, 7
    %v448 = vsub.s32 %v445, %v447
    %v449 = vrot.slane %v425, %v448
    %v450 = vcombine.low %v442, %v449
    %s452 = scalar_lea.vmem %s3, 18
    %453 = vst [vmem:[%s452] sm:$0x3f] %v450
    %v454 = vadd.f32 %v410, %v425
    %v455 = vmul.f32 %v429, 0.5
    %v456 = vmul.f32 %v430, 0.5
    %v457 = vmul.f32 %v431, 0.5
    %v458 = vadd.f32 %v455, %v209
    %v459 = vadd.f32 %v456, %v211
    %v460 = vadd.f32 %v457, %v280
    %vm461 = vcmp.ge.f32.partialorder %v458, 1.0
    %vm462 = vcmp.ge.f32.partialorder %v459, 1.0
    %vm463 = vcmp.ge.f32.partialorder %v460, 1.0
    %v464 = vsel %vm461, 1, 0
    %v465 = vsel %vm462, 1, 0
    %v466 = vsel %vm463, 1, 0
    %v467 = vcvt.s32.f32 %v464
    %v468 = vcvt.s32.f32 %v465
    %v469 = vcvt.s32.f32 %v466
    %v473 = vcombine.low %v467, %v468
    %v475 = vunpack.c.l.s4 1983009808
    %v476 = vunpack.c.0.s8 %v475
    %v477 = vlaneseq
    %v478 = vshrl.u32 %v477, 7
    %v479 = vsub.s32 %v476, %v478
    %v480 = vrot.slane %v473, %v479
    %v482 = vunpack.c.l.s4 1983009808
    %v483 = vunpack.c.0.s8 %v482
    %v484 = vlaneseq
    %v485 = vshrl.u32 %v484, 7
    %v486 = vsub.s32 %v483, %v485
    %v487 = vrot.slane %v469, %v486
    %v488 = vcombine.low %v480, %v487
    %s490 = scalar_lea.vmem %s3, 24
    %491 = vst [vmem:[%s490] sm:$0x3f] %v488
    %v492 = vadd.f32 %v454, %v469
    %493 = vst [vmem:[#allocation2] sm:$0x3] %v492
    // Predicated region
    $region14: #{snn_forward_arrays.7} parent=1 // pred_check
      _
    $region15: #{snn_forward_arrays.7} parent=1 // pred_check_branch
      %495 = sbr.rel (0) target = $region17
    $region16: #{snn_forward_arrays.7} parent=1 // pred_region
      _
    $region17: #{snn_forward_arrays.7} parent=1 // pred_fallthru
      _
    // Predicated region
    $region18: #{snn_forward_arrays.7} parent=1 // pred_check
      _
    $region19: #{snn_forward_arrays.7} parent=1 // pred_check_branch
      %497 = sbr.rel (0) target = $region21
    $region20: #{snn_forward_arrays.7} parent=1 // pred_region
      %s499 = ssub.s32 32, 32
      %500 = vsyncadd [#allocation3], %s499
      %s502 = sshll.u32 [#allocation2], 4
      %s503 = int_to_ptr.vmem [resolvable:$true] %s502
      %505 = dma.vmem_to_hbm [thread:$0]  %s503, 32, %s4, [#allocation3]
    $region21: #{snn_forward_arrays.7} parent=1 // pred_fallthru
      _
    // Predicated region
    $region22: #{snn_forward_arrays.7} parent=1 // pred_check
      _
    $region23: #{snn_forward_arrays.7} parent=1 // pred_check_branch
      %507 = sbr.rel (0) target = $region25
    $region24: #{snn_forward_arrays.7} parent=1 // pred_region
      _
    $region25: #{snn_forward_arrays.7} parent=1 // pred_fallthru
      _
    // Predicated region
    $region26: #{snn_forward_arrays.7} parent=1 // pred_check
      _
    $region27: #{snn_forward_arrays.7} parent=1 // pred_check_branch
      %509 = sbr.rel (0) target = $region29
    $region28: #{snn_forward_arrays.7} parent=1 // pred_region
      %510 = dma.done [#allocation3], 32
    $region29: #{snn_forward_arrays.7} parent=1 // pred_fallthru
      _
    %511 = vsyncpa [#allocation3], 1

</llo_original>
